<compile_context>
chip_gen: v6e
topology: v6e:2x2x1
jax: 0.10.0
libtpu: 0.0.40
codegen_flags: <defaults>
</compile_context>

<pallas_src>
import functools

import jax
import jax.numpy as jnp
from jax.experimental import pallas as pl
from jax.experimental.pallas import tpu as pltpu


def _lookup_small_table(ids_col, tab_ref, *, rows_out):
    """Row lookup in a small VMEM-resident (n_rows, H) table.

    ids_col: (rows_out, 1) int32. Returns (rows_out, H) f32.
    n_rows <= 2  -> single VPU select.
    n_rows  > 2  -> one-hot MXU matmul (no long compare/select chain).
    Out-of-range ids are undefined (PyTorch would raise); callers pass valid ids.
    """
    n_rows, hidden = tab_ref.shape
    tab = tab_ref[...]
    if n_rows <= 2:
        out = jnp.broadcast_to(tab[0:1, :], (rows_out, hidden))
        for i in range(1, n_rows):
            out = jnp.where(ids_col == i,
                            jnp.broadcast_to(tab[i:i + 1, :], (rows_out, hidden)),
                            out)
        return out
    iota = jax.lax.broadcasted_iota(jnp.int32, (rows_out, n_rows), 1)
    onehot = (ids_col == iota).astype(jnp.float32)          # (rows_out, n_rows)
    return jnp.dot(onehot, tab, preferred_element_type=jnp.float32)


def embeddings_kernel(ids_sref,        # scalar prefetch (SMEM): (B, S) int32 word ids
                      word_hbm,        # (V, H) f32, HBM (pl.ANY)
                      pos_ref,         # (TS, H) f32 VMEM tile of position table
                      type_tab_ref,    # (TV, H) f32 VMEM (whole tiny table)
                      seg_tab_ref,     # (64, H) f32 VMEM (whole tiny table)
                      type_ids_ref,    # (TS, 1) int32 VMEM
                      seg_ids_ref,     # (TS, 1) int32 VMEM
                      gamma_ref,       # (1, H) f32 VMEM
                      beta_ref,        # (1, H) f32 VMEM
                      out_ref,         # (TS, H) f32 VMEM output tile
                      gath_ref,        # scratch VMEM (TS, H) f32: gathered word rows
                      sem,             # DMA semaphore
                      *, eps, issue_unroll):
    ts, _ = out_ref.shape
    s = pl.program_id(0)
    b = pl.program_id(1)
    base = s * ts

    # 1) Issue one row-gather DMA per token (word_tab[id] HBM -> VMEM scratch),
    #    chunk-unrolled so scalar address math co-issues with descriptor pushes.
    # TODO(synk): cross-tile (one-grid-step-ahead) prefetch of these gathers and
    # waved issue (64-128 rows) would hide descriptor/HBM latency further.
    def _issue_row(r):
        wid = ids_sref[b, base + r]
        pltpu.make_async_copy(word_hbm.at[wid], gath_ref.at[r], sem).start()

    n_full = ts // issue_unroll
    if n_full > 0:
        @pl.loop(0, n_full)
        def _issue(w):
            r0 = pl.multiple_of(w * issue_unroll, issue_unroll)
            for j in range(issue_unroll):
                _issue_row(r0 + j)
    for j in range(ts % issue_unroll):
        _issue_row(n_full * issue_unroll + j)

    # 2) While the gather is in flight: position tile (direct BlockSpec slice),
    #    2-row type table via one VPU select, 64-row segment table via one-hot
    #    MXU matmul.
    emb = pos_ref[...]
    emb = emb + _lookup_small_table(type_ids_ref[...], type_tab_ref, rows_out=ts)
    emb = emb + _lookup_small_table(seg_ids_ref[...], seg_tab_ref, rows_out=ts)

    # 3) Drain all gather DMAs with a single bulk count-based wait
    #    (ts row-copies of H*4 bytes each signalled the same semaphore).
    pltpu.make_async_copy(word_hbm.at[pl.ds(0, ts)], gath_ref, sem).wait()
    emb = emb + gath_ref[...]

    # 4) LayerNorm over hidden (two-pass variance: no negative rsqrt argument,
    #    bit-closer to the reference).  rsqrt goes to the EUP slot.
    mean = jnp.mean(emb, axis=-1, keepdims=True)
    centered = emb - mean
    var = jnp.mean(centered * centered, axis=-1, keepdims=True)
    inv = jax.lax.rsqrt(var + eps)
    # TODO(synk): dropout is eval-mode identity; training-mode dropout would use
    # pltpu.prng_seed + pltpu.stateful_bernoulli.
    out_ref[...] = centered * inv * gamma_ref[...] + beta_ref[...]


def _pick_seq_tile(seq_len, max_tile=512):
    # Cap at 512 so double-buffered pos/out tiles + gather scratch stay well
    # inside v7x's 64 MiB VMEM even at H=768 f32.
    ts = max_tile
    while ts >= 8:
        if seq_len % ts == 0:
            return ts
        ts //= 2
    return seq_len  # small / odd seq: single full-seq block


def unbert_embeddings(input_ids, token_type_ids, news_segment_ids,
                      word_tab, pos_tab, type_tab, seg_tab,
                      gamma, beta, eps=1e-12):
    B, S = input_ids.shape
    H = word_tab.shape[1]
    TS = _pick_seq_tile(S)
    issue_unroll = 8 if TS % 8 == 0 else 1

    ids = input_ids.astype(jnp.int32)                         # -> SMEM (scalar prefetch)
    typ = token_type_ids.reshape(B, S, 1).astype(jnp.int32)
    seg = news_segment_ids.reshape(B, S, 1).astype(jnp.int32)
    pos_used = pos_tab[:S]                                    # only rows ever read

    grid_spec = pltpu.PrefetchScalarGridSpec(
        num_scalar_prefetch=1,
        # Batch innermost: the pos-table block index (s, 0) is unchanged across
        # the inner sweep, so the same tile is NOT re-DMA'd per batch element.
        grid=(S // TS, B),
        in_specs=[
            pl.BlockSpec(memory_space=pl.ANY),                            # word_tab (HBM)
            pl.BlockSpec((TS, H), lambda s, b, sids: (s, 0)),             # pos_tab tile
            pl.BlockSpec(type_tab.shape, lambda s, b, sids: (0, 0)),      # type_tab (VMEM)
            pl.BlockSpec(seg_tab.shape, lambda s, b, sids: (0, 0)),       # seg_tab (VMEM)
            pl.BlockSpec((None, TS, 1), lambda s, b, sids: (b, s, 0)),    # token_type ids
            pl.BlockSpec((None, TS, 1), lambda s, b, sids: (b, s, 0)),    # segment ids
            pl.BlockSpec((1, H), lambda s, b, sids: (0, 0)),              # gamma
            pl.BlockSpec((1, H), lambda s, b, sids: (0, 0)),              # beta
        ],
        out_specs=pl.BlockSpec((None, TS, H), lambda s, b, sids: (b, s, 0)),
        scratch_shapes=[
            pltpu.VMEM((TS, H), jnp.float32),   # gathered word rows
            pltpu.SemaphoreType.DMA,            # gather-DMA semaphore
        ],
    )

    return pl.pallas_call(
        functools.partial(embeddings_kernel, eps=eps, issue_unroll=issue_unroll),
        out_shape=jax.ShapeDtypeStruct((B, S, H), jnp.float32),
        grid_spec=grid_spec,
        compiler_params=pltpu.CompilerParams(
            dimension_semantics=("parallel", "parallel"),
            vmem_limit_bytes=32 * 1024 * 1024,
        ),
    )(ids, word_tab, pos_used, type_tab, seg_tab, typ, seg,
      gamma.reshape(1, H), beta.reshape(1, H))


def _reference(input_ids, token_type_ids, news_segment_ids,
               word_tab, pos_tab, type_tab, seg_tab, gamma, beta, eps=1e-12):
    B, S = input_ids.shape
    position_ids = jnp.broadcast_to(jnp.arange(S)[None, :], (B, S))
    emb = (word_tab[input_ids]
           + pos_tab[position_ids]
           + type_tab[token_type_ids]
           + seg_tab[news_segment_ids])
    mean = jnp.mean(emb, axis=-1, keepdims=True)
    var = jnp.mean((emb - mean) ** 2, axis=-1, keepdims=True)
    normed = (emb - mean) * jax.lax.rsqrt(var + eps)
    return normed * gamma + beta


if __name__ == "__main__":
    # Small config implied by the module's __init__.
    B, S, H = 2, 8, 32
    vocab_size = 128
    max_position_embeddings = 64
    type_vocab_size = 2
    num_segments = 64
    pad_token_id = 0
    eps = 1e-12

    key = jax.random.PRNGKey(0)
    k_w, k_p, k_t, k_s, k_ids, k_seg = jax.random.split(key, 6)

    # Deterministic synthetic parameters (nn.Embedding-like init; padding row zeroed).
    word_tab = 0.02 * jax.random.normal(k_w, (vocab_size, H), jnp.float32)
    word_tab = word_tab.at[pad_token_id].set(0.0)
    pos_tab = 0.02 * jax.random.normal(k_p, (max_position_embeddings, H), jnp.float32)
    type_tab = 0.02 * jax.random.normal(k_t, (type_vocab_size, H), jnp.float32)
    seg_tab = 0.02 * jax.random.normal(k_s, (num_segments, H), jnp.float32)
    gamma = jnp.ones((H,), jnp.float32)
    beta = jnp.zeros((H,), jnp.float32)

    # Example inputs.
    input_ids = jax.random.randint(k_ids, (B, S), 0, vocab_size, dtype=jnp.int32)
    token_type_ids = jnp.zeros((B, S), jnp.int32)
    news_segment_ids = jax.random.randint(k_seg, (B, S), 0, num_segments, dtype=jnp.int32)

    out = unbert_embeddings(input_ids, token_type_ids, news_segment_ids,
                            word_tab, pos_tab, type_tab, seg_tab,
                            gamma, beta, eps)
    out = jax.block_until_ready(out)

    ref = _reference(input_ids, token_type_ids, news_segment_ids,
                     word_tab, pos_tab, type_tab, seg_tab, gamma, beta, eps)
    assert out.shape == (B, S, H)
    assert jnp.allclose(out, ref, atol=1e-5, rtol=1e-5), "mismatch vs reference"

    print("KERNEL_OK")
</pallas_src>

<mosaic_0001>
module attributes {stable_mosaic.version = 11 : i64} {
  func.func @embeddings_kernel(%arg0: i32, %arg1: i32, %arg2: memref<2x8xi32, #tpu.memory_space<smem>>, %arg3: memref<128x32xf32, #tpu.memory_space<any>>, %arg4: memref<8x32xf32, #tpu.memory_space<vmem>>, %arg5: memref<2x32xf32, #tpu.memory_space<vmem>>, %arg6: memref<64x32xf32, #tpu.memory_space<vmem>>, %arg7: memref<1x8x1xi32, #tpu.memory_space<vmem>>, %arg8: memref<1x8x1xi32, #tpu.memory_space<vmem>>, %arg9: memref<1x32xf32, #tpu.memory_space<vmem>>, %arg10: memref<1x32xf32, #tpu.memory_space<vmem>>, %arg11: memref<1x8x32xf32, #tpu.memory_space<vmem>>, %arg12: memref<8x32xf32, #tpu.memory_space<vmem>>, %arg13: memref<!tpu.dma_semaphore, #tpu.memory_space<semaphore_mem>>) attributes {dimension_semantics = [#tpu.dimension_semantics<parallel>, #tpu.dimension_semantics<parallel>], iteration_bounds = array<i64: 1, 2>, scalar_prefetch = 1 : i64, scratch_operands = 2 : i64, tpu.core_type = #tpu.core_type<tc>, window_params = [{}, {transform_indices = @transform_1, window_bounds = array<i64: 8, 32>}, {pipeline_mode = #tpu.pipeline_mode<synchronous>, transform_indices = @transform_2, window_bounds = array<i64: 2, 32>}, {pipeline_mode = #tpu.pipeline_mode<synchronous>, transform_indices = @transform_3, window_bounds = array<i64: 64, 32>}, {transform_indices = @transform_4, window_bounds = array<i64: 1, 8, 1>}, {transform_indices = @transform_5, window_bounds = array<i64: 1, 8, 1>}, {pipeline_mode = #tpu.pipeline_mode<synchronous>, transform_indices = @transform_6, window_bounds = array<i64: 1, 32>}, {pipeline_mode = #tpu.pipeline_mode<synchronous>, transform_indices = @transform_7, window_bounds = array<i64: 1, 32>}, {transform_indices = @transform_8, window_bounds = array<i64: 1, 8, 32>}]} {
    %c8_i32 = arith.constant 8 : i32
    %0 = arith.muli %arg0, %c8_i32 : i32
    %c0_i32 = arith.constant 0 : i32
    %c1_i32 = arith.constant 1 : i32
    %1 = arith.muli %c0_i32, %c1_i32 : i32
    %c0_i32_0 = arith.constant 0 : i32
    %2 = arith.addi %c0_i32_0, %1 : i32
    %c8_i32_1 = arith.constant 8 : i32
    %3 = arith.muli %2, %c8_i32_1 : i32
    %4 = tpu.assume_multiple %3, 8 : i32
    %c0_i32_2 = arith.constant 0 : i32
    %5 = arith.addi %4, %c0_i32_2 : i32
    %6 = arith.addi %0, %5 : i32
    %7 = arith.index_cast %arg1 : i32 to index
    %8 = arith.index_cast %6 : i32 to index
    %9 = memref.load %arg2[%7, %8] : memref<2x8xi32, #tpu.memory_space<smem>>
    %c0_i32_3 = arith.constant 0 : i32
    %10 = tpu.memref_slice %arg3[%9, %c0_i32_3] : memref<128x32xf32, #tpu.memory_space<any>> -> memref<1x32xf32, #tpu.memory_space<any>>
    %11 = tpu.memref_squeeze %10 : memref<1x32xf32, #tpu.memory_space<any>> -> memref<32xf32, #tpu.memory_space<any>>
    %c0_i32_4 = arith.constant 0 : i32
    %12 = tpu.memref_slice %arg12[%5, %c0_i32_4] : memref<8x32xf32, #tpu.memory_space<vmem>> -> memref<1x32xf32, #tpu.memory_space<vmem>>
    %13 = tpu.memref_squeeze %12 : memref<1x32xf32, #tpu.memory_space<vmem>> -> memref<32xf32, #tpu.memory_space<vmem>>
    tpu.enqueue_dma source(%11 : memref<32xf32, #tpu.memory_space<any>>) target(%13 : memref<32xf32, #tpu.memory_space<vmem>>) target_semaphore(%arg13 : memref<!tpu.dma_semaphore, #tpu.memory_space<semaphore_mem>>)
    %c1_i32_5 = arith.constant 1 : i32
    %14 = arith.addi %4, %c1_i32_5 : i32
    %15 = arith.addi %0, %14 : i32
    %16 = arith.index_cast %arg1 : i32 to index
    %17 = arith.index_cast %15 : i32 to index
    %18 = memref.load %arg2[%16, %17] : memref<2x8xi32, #tpu.memory_space<smem>>
    %c0_i32_6 = arith.constant 0 : i32
    %19 = tpu.memref_slice %arg3[%18, %c0_i32_6] : memref<128x32xf32, #tpu.memory_space<any>> -> memref<1x32xf32, #tpu.memory_space<any>>
    %20 = tpu.memref_squeeze %19 : memref<1x32xf32, #tpu.memory_space<any>> -> memref<32xf32, #tpu.memory_space<any>>
    %c0_i32_7 = arith.constant 0 : i32
    %21 = tpu.memref_slice %arg12[%14, %c0_i32_7] : memref<8x32xf32, #tpu.memory_space<vmem>> -> memref<1x32xf32, #tpu.memory_space<vmem>>
    %22 = tpu.memref_squeeze %21 : memref<1x32xf32, #tpu.memory_space<vmem>> -> memref<32xf32, #tpu.memory_space<vmem>>
    tpu.enqueue_dma source(%20 : memref<32xf32, #tpu.memory_space<any>>) target(%22 : memref<32xf32, #tpu.memory_space<vmem>>) target_semaphore(%arg13 : memref<!tpu.dma_semaphore, #tpu.memory_space<semaphore_mem>>)
    %c2_i32 = arith.constant 2 : i32
    %23 = arith.addi %4, %c2_i32 : i32
    %24 = arith.addi %0, %23 : i32
    %25 = arith.index_cast %arg1 : i32 to index
    %26 = arith.index_cast %24 : i32 to index
    %27 = memref.load %arg2[%25, %26] : memref<2x8xi32, #tpu.memory_space<smem>>
    %c0_i32_8 = arith.constant 0 : i32
    %28 = tpu.memref_slice %arg3[%27, %c0_i32_8] : memref<128x32xf32, #tpu.memory_space<any>> -> memref<1x32xf32, #tpu.memory_space<any>>
    %29 = tpu.memref_squeeze %28 : memref<1x32xf32, #tpu.memory_space<any>> -> memref<32xf32, #tpu.memory_space<any>>
    %c0_i32_9 = arith.constant 0 : i32
    %30 = tpu.memref_slice %arg12[%23, %c0_i32_9] : memref<8x32xf32, #tpu.memory_space<vmem>> -> memref<1x32xf32, #tpu.memory_space<vmem>>
    %31 = tpu.memref_squeeze %30 : memref<1x32xf32, #tpu.memory_space<vmem>> -> memref<32xf32, #tpu.memory_space<vmem>>
    tpu.enqueue_dma source(%29 : memref<32xf32, #tpu.memory_space<any>>) target(%31 : memref<32xf32, #tpu.memory_space<vmem>>) target_semaphore(%arg13 : memref<!tpu.dma_semaphore, #tpu.memory_space<semaphore_mem>>)
    %c3_i32 = arith.constant 3 : i32
    %32 = arith.addi %4, %c3_i32 : i32
    %33 = arith.addi %0, %32 : i32
    %34 = arith.index_cast %arg1 : i32 to index
    %35 = arith.index_cast %33 : i32 to index
    %36 = memref.load %arg2[%34, %35] : memref<2x8xi32, #tpu.memory_space<smem>>
    %c0_i32_10 = arith.constant 0 : i32
    %37 = tpu.memref_slice %arg3[%36, %c0_i32_10] : memref<128x32xf32, #tpu.memory_space<any>> -> memref<1x32xf32, #tpu.memory_space<any>>
    %38 = tpu.memref_squeeze %37 : memref<1x32xf32, #tpu.memory_space<any>> -> memref<32xf32, #tpu.memory_space<any>>
    %c0_i32_11 = arith.constant 0 : i32
    %39 = tpu.memref_slice %arg12[%32, %c0_i32_11] : memref<8x32xf32, #tpu.memory_space<vmem>> -> memref<1x32xf32, #tpu.memory_space<vmem>>
    %40 = tpu.memref_squeeze %39 : memref<1x32xf32, #tpu.memory_space<vmem>> -> memref<32xf32, #tpu.memory_space<vmem>>
    tpu.enqueue_dma source(%38 : memref<32xf32, #tpu.memory_space<any>>) target(%40 : memref<32xf32, #tpu.memory_space<vmem>>) target_semaphore(%arg13 : memref<!tpu.dma_semaphore, #tpu.memory_space<semaphore_mem>>)
    %c4_i32 = arith.constant 4 : i32
    %41 = arith.addi %4, %c4_i32 : i32
    %42 = arith.addi %0, %41 : i32
    %43 = arith.index_cast %arg1 : i32 to index
    %44 = arith.index_cast %42 : i32 to index
    %45 = memref.load %arg2[%43, %44] : memref<2x8xi32, #tpu.memory_space<smem>>
    %c0_i32_12 = arith.constant 0 : i32
    %46 = tpu.memref_slice %arg3[%45, %c0_i32_12] : memref<128x32xf32, #tpu.memory_space<any>> -> memref<1x32xf32, #tpu.memory_space<any>>
    %47 = tpu.memref_squeeze %46 : memref<1x32xf32, #tpu.memory_space<any>> -> memref<32xf32, #tpu.memory_space<any>>
    %c0_i32_13 = arith.constant 0 : i32
    %48 = tpu.memref_slice %arg12[%41, %c0_i32_13] : memref<8x32xf32, #tpu.memory_space<vmem>> -> memref<1x32xf32, #tpu.memory_space<vmem>>
    %49 = tpu.memref_squeeze %48 : memref<1x32xf32, #tpu.memory_space<vmem>> -> memref<32xf32, #tpu.memory_space<vmem>>
    tpu.enqueue_dma source(%47 : memref<32xf32, #tpu.memory_space<any>>) target(%49 : memref<32xf32, #tpu.memory_space<vmem>>) target_semaphore(%arg13 : memref<!tpu.dma_semaphore, #tpu.memory_space<semaphore_mem>>)
    %c5_i32 = arith.constant 5 : i32
    %50 = arith.addi %4, %c5_i32 : i32
    %51 = arith.addi %0, %50 : i32
    %52 = arith.index_cast %arg1 : i32 to index
    %53 = arith.index_cast %51 : i32 to index
    %54 = memref.load %arg2[%52, %53] : memref<2x8xi32, #tpu.memory_space<smem>>
    %c0_i32_14 = arith.constant 0 : i32
    %55 = tpu.memref_slice %arg3[%54, %c0_i32_14] : memref<128x32xf32, #tpu.memory_space<any>> -> memref<1x32xf32, #tpu.memory_space<any>>
    %56 = tpu.memref_squeeze %55 : memref<1x32xf32, #tpu.memory_space<any>> -> memref<32xf32, #tpu.memory_space<any>>
    %c0_i32_15 = arith.constant 0 : i32
    %57 = tpu.memref_slice %arg12[%50, %c0_i32_15] : memref<8x32xf32, #tpu.memory_space<vmem>> -> memref<1x32xf32, #tpu.memory_space<vmem>>
    %58 = tpu.memref_squeeze %57 : memref<1x32xf32, #tpu.memory_space<vmem>> -> memref<32xf32, #tpu.memory_space<vmem>>
    tpu.enqueue_dma source(%56 : memref<32xf32, #tpu.memory_space<any>>) target(%58 : memref<32xf32, #tpu.memory_space<vmem>>) target_semaphore(%arg13 : memref<!tpu.dma_semaphore, #tpu.memory_space<semaphore_mem>>)
    %c6_i32 = arith.constant 6 : i32
    %59 = arith.addi %4, %c6_i32 : i32
    %60 = arith.addi %0, %59 : i32
    %61 = arith.index_cast %arg1 : i32 to index
    %62 = arith.index_cast %60 : i32 to index
    %63 = memref.load %arg2[%61, %62] : memref<2x8xi32, #tpu.memory_space<smem>>
    %c0_i32_16 = arith.constant 0 : i32
    %64 = tpu.memref_slice %arg3[%63, %c0_i32_16] : memref<128x32xf32, #tpu.memory_space<any>> -> memref<1x32xf32, #tpu.memory_space<any>>
    %65 = tpu.memref_squeeze %64 : memref<1x32xf32, #tpu.memory_space<any>> -> memref<32xf32, #tpu.memory_space<any>>
    %c0_i32_17 = arith.constant 0 : i32
    %66 = tpu.memref_slice %arg12[%59, %c0_i32_17] : memref<8x32xf32, #tpu.memory_space<vmem>> -> memref<1x32xf32, #tpu.memory_space<vmem>>
    %67 = tpu.memref_squeeze %66 : memref<1x32xf32, #tpu.memory_space<vmem>> -> memref<32xf32, #tpu.memory_space<vmem>>
    tpu.enqueue_dma source(%65 : memref<32xf32, #tpu.memory_space<any>>) target(%67 : memref<32xf32, #tpu.memory_space<vmem>>) target_semaphore(%arg13 : memref<!tpu.dma_semaphore, #tpu.memory_space<semaphore_mem>>)
    %c7_i32 = arith.constant 7 : i32
    %68 = arith.addi %4, %c7_i32 : i32
    %69 = arith.addi %0, %68 : i32
    %70 = arith.index_cast %arg1 : i32 to index
    %71 = arith.index_cast %69 : i32 to index
    %72 = memref.load %arg2[%70, %71] : memref<2x8xi32, #tpu.memory_space<smem>>
    %c0_i32_18 = arith.constant 0 : i32
    %73 = tpu.memref_slice %arg3[%72, %c0_i32_18] : memref<128x32xf32, #tpu.memory_space<any>> -> memref<1x32xf32, #tpu.memory_space<any>>
    %74 = tpu.memref_squeeze %73 : memref<1x32xf32, #tpu.memory_space<any>> -> memref<32xf32, #tpu.memory_space<any>>
    %c0_i32_19 = arith.constant 0 : i32
    %75 = tpu.memref_slice %arg12[%68, %c0_i32_19] : memref<8x32xf32, #tpu.memory_space<vmem>> -> memref<1x32xf32, #tpu.memory_space<vmem>>
    %76 = tpu.memref_squeeze %75 : memref<1x32xf32, #tpu.memory_space<vmem>> -> memref<32xf32, #tpu.memory_space<vmem>>
    tpu.enqueue_dma source(%74 : memref<32xf32, #tpu.memory_space<any>>) target(%76 : memref<32xf32, #tpu.memory_space<vmem>>) target_semaphore(%arg13 : memref<!tpu.dma_semaphore, #tpu.memory_space<semaphore_mem>>)
    %c1_i32_20 = arith.constant 1 : i32
    %c0 = arith.constant 0 : index
    %c0_21 = arith.constant 0 : index
    %77 = vector.load %arg4[%c0, %c0_21] : memref<8x32xf32, #tpu.memory_space<vmem>>, vector<8x32xf32>
    %c0_22 = arith.constant 0 : index
    %c0_23 = arith.constant 0 : index
    %c0_24 = arith.constant 0 : index
    %78 = vector.load %arg7[%c0_22, %c0_23, %c0_24] : memref<1x8x1xi32, #tpu.memory_space<vmem>>, vector<1x8x1xi32>
    %79 = vector.shape_cast %78 : vector<1x8x1xi32> to vector<8x1xi32>
    %c0_25 = arith.constant 0 : index
    %c0_26 = arith.constant 0 : index
    %80 = vector.load %arg5[%c0_25, %c0_26] : memref<2x32xf32, #tpu.memory_space<vmem>>, vector<2x32xf32>
    %81 = vector.extract_strided_slice %80 {offsets = [0, 0], sizes = [1, 32], strides = [1, 1]} : vector<2x32xf32> to vector<1x32xf32>
    %82 = vector.shape_cast %81 : vector<1x32xf32> to vector<1x32xf32>
    %83 = vector.broadcast %82 : vector<1x32xf32> to vector<8x32xf32>
    %c1_i32_27 = arith.constant 1 : i32
    %84 = vector.broadcast %c1_i32_27 : i32 to vector<8x1xi32>
    %85 = arith.cmpi eq, %79, %84 : vector<8x1xi32>
    %86 = vector.extract_strided_slice %80 {offsets = [1, 0], sizes = [1, 32], strides = [1, 1]} : vector<2x32xf32> to vector<1x32xf32>
    %87 = vector.shape_cast %86 : vector<1x32xf32> to vector<1x32xf32>
    %88 = vector.broadcast %87 : vector<1x32xf32> to vector<8x32xf32>
    %89 = vector.shape_cast %85 : vector<8x1xi1> to vector<8x1xi1>
    %90 = vector.broadcast %89 : vector<8x1xi1> to vector<8x32xi1>
    %91 = arith.select %90, %88, %83 : vector<8x32xi1>, vector<8x32xf32>
    %92 = arith.addf %77, %91 : vector<8x32xf32>
    %c0_28 = arith.constant 0 : index
    %c0_29 = arith.constant 0 : index
    %c0_30 = arith.constant 0 : index
    %93 = vector.load %arg8[%c0_28, %c0_29, %c0_30] : memref<1x8x1xi32, #tpu.memory_space<vmem>>, vector<1x8x1xi32>
    %94 = vector.shape_cast %93 : vector<1x8x1xi32> to vector<8x1xi32>
    %c0_31 = arith.constant 0 : index
    %c0_32 = arith.constant 0 : index
    %95 = vector.load %arg6[%c0_31, %c0_32] : memref<64x32xf32, #tpu.memory_space<vmem>>, vector<64x32xf32>
    %96 = tpu.iota {dimensions = array<i32: 1>} : vector<8x64xi32>
    %97 = vector.broadcast %94 : vector<8x1xi32> to vector<8x64xi32>
    %98 = arith.cmpi eq, %97, %96 : vector<8x64xi32>
    %99 = arith.extui %98 : vector<8x64xi1> to vector<8x64xi32>
    %100 = arith.sitofp %99 : vector<8x64xi32> to vector<8x64xf32>
    %cst = arith.constant dense<0.000000e+00> : vector<8x32xf32>
    %101 = tpu.matmul %100, %95, %cst {dimension_numbers = #tpu.dot_dimension_numbers<[1], [0], [0], [1], [0, 0, 1, 1], [], []>} : vector<8x64xf32>, vector<64x32xf32>, vector<8x32xf32> -> vector<8x32xf32>
    %102 = arith.addf %92, %101 : vector<8x32xf32>
    %c0_i32_33 = arith.constant 0 : i32
    %c0_i32_34 = arith.constant 0 : i32
    %103 = tpu.memref_slice %arg3[%c0_i32_33, %c0_i32_34] : memref<128x32xf32, #tpu.memory_space<any>> -> memref<8x32xf32, #tpu.memory_space<any>>
    tpu.wait_dma2 semaphore(%arg13 : memref<!tpu.dma_semaphore, #tpu.memory_space<semaphore_mem>>) src(%103 : memref<8x32xf32, #tpu.memory_space<any>>) dst(%arg12 : memref<8x32xf32, #tpu.memory_space<vmem>>)
    %c0_35 = arith.constant 0 : index
    %c0_36 = arith.constant 0 : index
    %104 = vector.load %arg12[%c0_35, %c0_36] : memref<8x32xf32, #tpu.memory_space<vmem>>, vector<8x32xf32>
    %105 = arith.addf %102, %104 : vector<8x32xf32>
    %cst_37 = arith.constant dense<0.000000e+00> : vector<8xf32>
    %106 = vector.multi_reduction <add>, %105, %cst_37 [1] : vector<8x32xf32> to vector<8xf32>
    %107 = vector.shape_cast %106 : vector<8xf32> to vector<8x1xf32>
    %cst_38 = arith.constant 3.200000e+01 : f32
    %108 = vector.broadcast %cst_38 : f32 to vector<8x1xf32>
    %109 = arith.divf %107, %108 : vector<8x1xf32>
    %110 = vector.broadcast %109 : vector<8x1xf32> to vector<8x32xf32>
    %111 = arith.subf %105, %110 : vector<8x32xf32>
    %112 = arith.mulf %111, %111 : vector<8x32xf32>
    %cst_39 = arith.constant dense<0.000000e+00> : vector<8xf32>
    %113 = vector.multi_reduction <add>, %112, %cst_39 [1] : vector<8x32xf32> to vector<8xf32>
    %114 = vector.shape_cast %113 : vector<8xf32> to vector<8x1xf32>
    %cst_40 = arith.constant 3.200000e+01 : f32
    %115 = vector.broadcast %cst_40 : f32 to vector<8x1xf32>
    %116 = arith.divf %114, %115 : vector<8x1xf32>
    %cst_41 = arith.constant 9.99999996E-13 : f32
    %117 = vector.broadcast %cst_41 : f32 to vector<8x1xf32>
    %118 = arith.addf %116, %117 : vector<8x1xf32>
    %119 = math.rsqrt %118 : vector<8x1xf32>
    %120 = vector.broadcast %119 : vector<8x1xf32> to vector<8x32xf32>
    %121 = arith.mulf %111, %120 : vector<8x32xf32>
    %c0_42 = arith.constant 0 : index
    %c0_43 = arith.constant 0 : index
    %122 = vector.load %arg9[%c0_42, %c0_43] : memref<1x32xf32, #tpu.memory_space<vmem>>, vector<1x32xf32>
    %123 = vector.broadcast %122 : vector<1x32xf32> to vector<8x32xf32>
    %124 = arith.mulf %121, %123 : vector<8x32xf32>
    %c0_44 = arith.constant 0 : index
    %c0_45 = arith.constant 0 : index
    %125 = vector.load %arg10[%c0_44, %c0_45] : memref<1x32xf32, #tpu.memory_space<vmem>>, vector<1x32xf32>
    %126 = vector.broadcast %125 : vector<1x32xf32> to vector<8x32xf32>
    %127 = arith.addf %124, %126 : vector<8x32xf32>
    %c0_46 = arith.constant 0 : index
    %c0_47 = arith.constant 0 : index
    %c0_48 = arith.constant 0 : index
    %128 = vector.load %arg11[%c0_46, %c0_47, %c0_48] : memref<1x8x32xf32, #tpu.memory_space<vmem>>, vector<1x8x32xf32>
    %129 = vector.shape_cast %128 : vector<1x8x32xf32> to vector<8x32xf32>
    %130 = vector.shape_cast %127 : vector<8x32xf32> to vector<1x8x32xf32>
    tpu.vector_store %arg11[%c0_46, %c0_47, %c0_48], %130 {strides = array<i32>} : memref<1x8x32xf32, #tpu.memory_space<vmem>>, vector<1x8x32xf32>,
    return
  }
  func.func @transform_1(%arg0: i32, %arg1: i32, %arg2: memref<2x8xi32, #tpu.memory_space<smem>>) -> (i32, i32) {
    %c0_i32 = arith.constant 0 : i32
    %c0_i32_0 = arith.constant 0 : i32
    return %arg0, %c0_i32 : i32, i32
  }
  func.func @transform_2(%arg0: i32, %arg1: i32, %arg2: memref<2x8xi32, #tpu.memory_space<smem>>) -> (i32, i32) {
    %c0_i32 = arith.constant 0 : i32
    %c0_i32_0 = arith.constant 0 : i32
    %c0_i32_1 = arith.constant 0 : i32
    return %c0_i32, %c0_i32_0 : i32, i32
  }
  func.func @transform_3(%arg0: i32, %arg1: i32, %arg2: memref<2x8xi32, #tpu.memory_space<smem>>) -> (i32, i32) {
    %c0_i32 = arith.constant 0 : i32
    %c0_i32_0 = arith.constant 0 : i32
    %c0_i32_1 = arith.constant 0 : i32
    return %c0_i32, %c0_i32_0 : i32, i32
  }
  func.func @transform_4(%arg0: i32, %arg1: i32, %arg2: memref<2x8xi32, #tpu.memory_space<smem>>) -> (i32, i32, i32) {
    %c0_i32 = arith.constant 0 : i32
    %c0_i32_0 = arith.constant 0 : i32
    return %arg1, %arg0, %c0_i32 : i32, i32, i32
  }
  func.func @transform_5(%arg0: i32, %arg1: i32, %arg2: memref<2x8xi32, #tpu.memory_space<smem>>) -> (i32, i32, i32) {
    %c0_i32 = arith.constant 0 : i32
    %c0_i32_0 = arith.constant 0 : i32
    return %arg1, %arg0, %c0_i32 : i32, i32, i32
  }
  func.func @transform_6(%arg0: i32, %arg1: i32, %arg2: memref<2x8xi32, #tpu.memory_space<smem>>) -> (i32, i32) {
    %c0_i32 = arith.constant 0 : i32
    %c0_i32_0 = arith.constant 0 : i32
    %c0_i32_1 = arith.constant 0 : i32
    return %c0_i32, %c0_i32_0 : i32, i32
  }
  func.func @transform_7(%arg0: i32, %arg1: i32, %arg2: memref<2x8xi32, #tpu.memory_space<smem>>) -> (i32, i32) {
    %c0_i32 = arith.constant 0 : i32
    %c0_i32_0 = arith.constant 0 : i32
    %c0_i32_1 = arith.constant 0 : i32
    return %c0_i32, %c0_i32_0 : i32, i32
  }
  func.func @transform_8(%arg0: i32, %arg1: i32, %arg2: memref<2x8xi32, #tpu.memory_space<smem>>) -> (i32, i32, i32) {
    %c0_i32 = arith.constant 0 : i32
    %c0_i32_0 = arith.constant 0 : i32
    return %arg1, %arg0, %c0_i32 : i32, i32, i32
  }
}

</mosaic_0001>

<llo_original>
// kernel: tpu_custom_call.1
$region0: #{tpu_custom_call.1}
  #allocation0 [shape = 'u32[]', space=smem, size = 0x4, offset = 0x4, fixed_abs, tag = 'smem constant byte address 0x4 - core index']
  #allocation1 [shape = 'u32[144,128]{1,0:T(1,128)}', space=vmem, size = 0x12000, scoped, tag = 'internal scratch']
  #allocation2 [shape = 'f32[8,32]{1,0:T(8,128)}', space=vmem, size = 0x1000, scoped, tag = 'scratch operand']
  #allocation3 [shape = 's32[1]{0}', space=sflag, size = 0x4, scoped, tag = 'scratch operand']
  #allocation4 [shape = 's32[1]{0}', space=sflag, size = 0x4, scoped, tag = 'scoped memory for tpu_custom_call.1']
  #allocation5 [shape = 'u8[1024]{0}', space=smem, size = 0x400, scoped, tag = 'prefetched SMEM operand 0']
  #allocation8 [shape = 's32[]', space=sflag, size = 0x4, offset = 0, fixed_abs, tag = 'sflag constant byte address 0x0 - dummy sync flag']
  #allocation9 [shape = 's32[]', space=sflag, size = 0x4, offset = 0, fixed_abs, tag = 'sflag constant byte address 0x0 - dummy sync flag']
  #allocation10 [shape = 's32[]', space=sflag, size = 0x4, offset = 0, fixed_abs, tag = 'sflag constant byte address 0x0 - dummy sync flag']
  #allocation11 [shape = 's32[]', space=sflag, size = 0x4, offset = 0, fixed_abs, tag = 'sflag constant byte address 0x0 - dummy sync flag']
  #allocation12 [shape = 's32[]', space=sflag, size = 0x4, offset = 0, fixed_abs, tag = 'sflag constant byte address 0x0 - dummy sync flag']
  #allocation13 [shape = 's32[]', space=sflag, size = 0x4, offset = 0, fixed_abs, tag = 'sflag constant byte address 0x0 - dummy sync flag']
  #allocation14 [shape = 's32[]', space=sflag, size = 0x4, offset = 0, fixed_abs, tag = 'sflag constant byte address 0x0 - dummy sync flag']
  #allocation15 [shape = 's32[]', space=sflag, size = 0x4, offset = 0, fixed_abs, tag = 'sflag constant byte address 0x0 - dummy sync flag']
  %s0 = inlined_call_operand.vmem [shape: s32[2,8], index: 0, kind: input, shape index: {}]
  %s1 = inlined_call_operand.vmem [shape: f32[128,32], index: 1, kind: input, shape index: {}]
  %s2 = inlined_call_operand.vmem [shape: f32[8,32], index: 2, kind: input, shape index: {}]
  %s3 = inlined_call_operand.vmem [shape: f32[2,32], index: 3, kind: input, shape index: {}]
  %s4 = inlined_call_operand.vmem [shape: f32[64,32], index: 4, kind: input, shape index: {}]
  %s5 = inlined_call_operand.vmem [shape: s32[2,8,1], index: 5, kind: input, shape index: {}]
  %s6 = inlined_call_operand.vmem [shape: s32[2,8,1], index: 6, kind: input, shape index: {}]
  %s7 = inlined_call_operand.vmem [shape: f32[1,32], index: 7, kind: input, shape index: {}]
  %s8 = inlined_call_operand.vmem [shape: f32[1,32], index: 8, kind: input, shape index: {}]
  %s9 = inlined_call_operand.hbm [shape: f32[2,8,32], index: 9, kind: output, shape index: {}]
  %s10 = sld [smem:[#allocation0]]
  $region301: #{tpu_custom_call.1} parent=0
    _
  %s12 = ssub.s32 1, %s10
  %s13 = scalar_select 0, %s12, %s10
  %s14 = sshll.u32 %s0, 4
  %s15 = int_to_ptr.vmem [resolvable:$true] %s14
  %17 = dma.vmem_to_smem %s15, 32, [#allocation5], [#allocation4]
  %18 = dma.done [#allocation4], 32
  %19 = sfence
  $region1: #{tpu_custom_call.1} parent=0
    #allocation6 [shape = 'u8[8192]{0}', space=vmem, size = 0x2000, scoped, tag = 'output window, operand 0']
    #allocation7 [shape = 's32[2]{0}', space=sflag, size = 0x8, scoped, tag = 'scoped memory for tpu_custom_call.1']
    %20 = vsyncpa [#allocation7], 0
    %s21 = scalar_lea.sflag [#allocation7], 1
    %22 = vsyncpa %s21, 0
    loop: start=0, step=1, limit=4
    $region2: #{tpu_custom_call.1} parent=1 // loop_pre_header
      _
    $region3: #{tpu_custom_call.1} parent=1 // loop_header
      %s24 = sphi 0, %s28
      %p25 = scmp.ge.s32.totalorder %s24, 4
      %s31 = sphi 0, %s43
      %s32 = sphi 0, %s39
      %s33 = sphi 0, %s31
      %s34 = sphi 0, %s32
      %s35 = sphi 0, %s33
      %s36 = sphi 0, %s34
      %s46 = sphi 0, %s48
      %s49 = sphi 0, %s46
      %s50 = sphi 0, %s49
      %s66 = sphi 0, %s50
      %s70 = sphi 0, %s70
      %s72 = sphi 0, %s70
      %s73 = sphi 0, %s72
      %s87 = sphi 0, %s73
      %s91 = sphi 0, %s91
      %s93 = sphi 0, %s91
      %s94 = sphi 0, %s93
      %s108 = sphi 0, %s94
      %s116 = sphi 0, %s118
      %s119 = sphi 0, %s116
      %s120 = sphi 0, %s119
      %s136 = sphi 0, %s120
      %s144 = sphi 0, %s146
      %s147 = sphi 0, %s144
      %s148 = sphi 0, %s147
      %s164 = sphi 0, %s148
      %s168 = sphi 0, %s168
      %s170 = sphi 0, %s168
      %s171 = sphi 0, %s170
      %s185 = sphi 0, %s171
      %s189 = sphi 0, %s189
      %s191 = sphi 0, %s189
      %s192 = sphi 0, %s191
      %s206 = sphi 0, %s192
      %s214 = sphi 0, %s216
      %s217 = sphi 0, %s214
      %s218 = sphi 0, %s217
      %s234 = sphi 0, %s218
    $region4: #{tpu_custom_call.1} parent=1 // loop_header_branch
      %27 = sbr.rel (%p25) target = $region8
    $region5: #{tpu_custom_call.1} parent=1 // loop_body
      %s29 = ssub.s32 %s24, 1
      %s30 = ssub.s32 %s24, 2
      %s37 = sadd.s32 1, %s32
      %p38 = scmp.ge.s32.totalorder %s37, 2
      %s39 = scalar_select %p38, 0, %s37
      %s40 = sadd.s32 1, %s31
      %s41 = scalar_select %p38, %s40, %s31
      %p42 = scmp.ge.s32.totalorder %s41, 1
      %s43 = scalar_select %p42, 0, %s41
      %s44 = ssub.s32 %s31, %s43
      %p45 = scmp.eq.s32.totalorder %s44, 0
      %s47 = sadd.s32 %s46, 1
      %s48 = scalar_select %p45, %s46, %s47
      %p51 = pneg %p45
      %p52 = scmp.eq.s32.totalorder %s24, 1
      %p53 = por %p51, %p52
      %p54 = scmp.ne.s32.totalorder %s46, %s49
      %p55 = scmp.eq.s32.totalorder %s24, 0
      %p56 = por %p54, %p55
      %p57 = scmp.ne.s32.totalorder %s46, %s49
      %p58 = scmp.eq.s32.totalorder %s29, 1
      %p59 = por %p57, %p58
      %p60 = scmp.ne.s32.totalorder %s49, %s50
      %p61 = scmp.eq.s32.totalorder %s29, 0
      %p62 = por %p60, %p61
      %p63 = scmp.ne.s32.totalorder %s49, %s50
      %p64 = scmp.eq.s32.totalorder %s30, 1
      %p65 = por %p63, %p64
      %p67 = scmp.ne.s32.totalorder %s50, %s66
      %p68 = scmp.eq.s32.totalorder %s30, 0
      %p69 = por %p67, %p68
      %s71 = sadd.s32 %s70, 1
      %p74 = scmp.eq.s32.totalorder %s24, 1
      %p75 = scmp.ne.s32.totalorder %s70, %s72
      %p76 = scmp.eq.s32.totalorder %s24, 0
      %p77 = por %p75, %p76
      %p78 = scmp.ne.s32.totalorder %s70, %s72
      %p79 = scmp.eq.s32.totalorder %s29, 1
      %p80 = por %p78, %p79
      %p81 = scmp.ne.s32.totalorder %s72, %s73
      %p82 = scmp.eq.s32.totalorder %s29, 0
      %p83 = por %p81, %p82
      %p84 = scmp.ne.s32.totalorder %s72, %s73
      %p85 = scmp.eq.s32.totalorder %s30, 1
      %p86 = por %p84, %p85
      %p88 = scmp.ne.s32.totalorder %s73, %s87
      %p89 = scmp.eq.s32.totalorder %s30, 0
      %p90 = por %p88, %p89
      %s92 = sadd.s32 %s91, 1
      %p95 = scmp.eq.s32.totalorder %s24, 1
      %p96 = scmp.ne.s32.totalorder %s91, %s93
      %p97 = scmp.eq.s32.totalorder %s24, 0
      %p98 = por %p96, %p97
      %p99 = scmp.ne.s32.totalorder %s91, %s93
      %p100 = scmp.eq.s32.totalorder %s29, 1
      %p101 = por %p99, %p100
      %p102 = scmp.ne.s32.totalorder %s93, %s94
      %p103 = scmp.eq.s32.totalorder %s29, 0
      %p104 = por %p102, %p103
      %p105 = scmp.ne.s32.totalorder %s93, %s94
      %p106 = scmp.eq.s32.totalorder %s30, 1
      %p107 = por %p105, %p106
      %p109 = scmp.ne.s32.totalorder %s94, %s108
      %p110 = scmp.eq.s32.totalorder %s30, 0
      %p111 = por %p109, %p110
      %s112 = ssub.s32 %s32, %s39
      %s113 = ssub.s32 %s31, %s43
      %s114 = sor.u32 %s112, %s113
      %p115 = scmp.eq.s32.totalorder %s114, 0
      %s117 = sadd.s32 %s116, 1
      %s118 = scalar_select %p115, %s116, %s117
      %p121 = pneg %p115
      %p122 = scmp.eq.s32.totalorder %s24, 1
      %p123 = por %p121, %p122
      %p124 = scmp.ne.s32.totalorder %s116, %s119
      %p125 = scmp.eq.s32.totalorder %s24, 0
      %p126 = por %p124, %p125
      %p127 = scmp.ne.s32.totalorder %s116, %s119
      %p128 = scmp.eq.s32.totalorder %s29, 1
      %p129 = por %p127, %p128
      %p130 = scmp.ne.s32.totalorder %s119, %s120
      %p131 = scmp.eq.s32.totalorder %s29, 0
      %p132 = por %p130, %p131
      %p133 = scmp.ne.s32.totalorder %s119, %s120
      %p134 = scmp.eq.s32.totalorder %s30, 1
      %p135 = por %p133, %p134
      %p137 = scmp.ne.s32.totalorder %s120, %s136
      %p138 = scmp.eq.s32.totalorder %s30, 0
      %p139 = por %p137, %p138
      %s140 = ssub.s32 %s32, %s39
      %s141 = ssub.s32 %s31, %s43
      %s142 = sor.u32 %s140, %s141
      %p143 = scmp.eq.s32.totalorder %s142, 0
      %s145 = sadd.s32 %s144, 1
      %s146 = scalar_select %p143, %s144, %s145
      %p149 = pneg %p143
      %p150 = scmp.eq.s32.totalorder %s24, 1
      %p151 = por %p149, %p150
      %p152 = scmp.ne.s32.totalorder %s144, %s147
      %p153 = scmp.eq.s32.totalorder %s24, 0
      %p154 = por %p152, %p153
      %p155 = scmp.ne.s32.totalorder %s144, %s147
      %p156 = scmp.eq.s32.totalorder %s29, 1
      %p157 = por %p155, %p156
      %p158 = scmp.ne.s32.totalorder %s147, %s148
      %p159 = scmp.eq.s32.totalorder %s29, 0
      %p160 = por %p158, %p159
      %p161 = scmp.ne.s32.totalorder %s147, %s148
      %p162 = scmp.eq.s32.totalorder %s30, 1
      %p163 = por %p161, %p162
      %p165 = scmp.ne.s32.totalorder %s148, %s164
      %p166 = scmp.eq.s32.totalorder %s30, 0
      %p167 = por %p165, %p166
      %s169 = sadd.s32 %s168, 1
      %p172 = scmp.eq.s32.totalorder %s24, 1
      %p173 = scmp.ne.s32.totalorder %s168, %s170
      %p174 = scmp.eq.s32.totalorder %s24, 0
      %p175 = por %p173, %p174
      %p176 = scmp.ne.s32.totalorder %s168, %s170
      %p177 = scmp.eq.s32.totalorder %s29, 1
      %p178 = por %p176, %p177
      %p179 = scmp.ne.s32.totalorder %s170, %s171
      %p180 = scmp.eq.s32.totalorder %s29, 0
      %p181 = por %p179, %p180
      %p182 = scmp.ne.s32.totalorder %s170, %s171
      %p183 = scmp.eq.s32.totalorder %s30, 1
      %p184 = por %p182, %p183
      %p186 = scmp.ne.s32.totalorder %s171, %s185
      %p187 = scmp.eq.s32.totalorder %s30, 0
      %p188 = por %p186, %p187
      %s190 = sadd.s32 %s189, 1
      %p193 = scmp.eq.s32.totalorder %s24, 1
      %p194 = scmp.ne.s32.totalorder %s189, %s191
      %p195 = scmp.eq.s32.totalorder %s24, 0
      %p196 = por %p194, %p195
      %p197 = scmp.ne.s32.totalorder %s189, %s191
      %p198 = scmp.eq.s32.totalorder %s29, 1
      %p199 = por %p197, %p198
      %p200 = scmp.ne.s32.totalorder %s191, %s192
      %p201 = scmp.eq.s32.totalorder %s29, 0
      %p202 = por %p200, %p201
      %p203 = scmp.ne.s32.totalorder %s191, %s192
      %p204 = scmp.eq.s32.totalorder %s30, 1
      %p205 = por %p203, %p204
      %p207 = scmp.ne.s32.totalorder %s192, %s206
      %p208 = scmp.eq.s32.totalorder %s30, 0
      %p209 = por %p207, %p208
      %s210 = ssub.s32 %s32, %s39
      %s211 = ssub.s32 %s31, %s43
      %s212 = sor.u32 %s210, %s211
      %p213 = scmp.eq.s32.totalorder %s212, 0
      %s215 = sadd.s32 %s214, 1
      %s216 = scalar_select %p213, %s214, %s215
      %p219 = pneg %p213
      %p220 = scmp.eq.s32.totalorder %s24, 1
      %p221 = por %p219, %p220
      %p222 = scmp.ne.s32.totalorder %s214, %s217
      %p223 = scmp.eq.s32.totalorder %s24, 0
      %p224 = por %p222, %p223
      %p225 = scmp.ne.s32.totalorder %s214, %s217
      %p226 = scmp.eq.s32.totalorder %s29, 1
      %p227 = por %p225, %p226
      %p228 = scmp.ne.s32.totalorder %s217, %s218
      %p229 = scmp.eq.s32.totalorder %s29, 0
      %p230 = por %p228, %p229
      %p231 = scmp.ne.s32.totalorder %s217, %s218
      %p232 = scmp.eq.s32.totalorder %s30, 1
      %p233 = por %p231, %p232
      %p235 = scmp.ne.s32.totalorder %s218, %s234
      %p236 = scmp.eq.s32.totalorder %s30, 0
      %p237 = por %p235, %p236
      %p238 = scmp.le.s32.totalorder 1, %s24
      %p239 = scmp.lt.s32.totalorder %s24, 3
      %p240 = pnand %p238, %p239
      %p241 = pneg %p240
      // Predicated region
      $region9: #{tpu_custom_call.1} parent=5 // pred_check
        _
      $region10: #{tpu_custom_call.1} parent=5 // pred_check_branch
        %243 = sbr.rel (%p240) target = $region12
      $region11: #{tpu_custom_call.1} parent=5 // pred_region
        %s244 = ssub.s32 %s24, 1
        // Predicated region
        $region13: #{tpu_custom_call.1} parent=11 // pred_check
          %p245 = pneg %p62
        $region14: #{tpu_custom_call.1} parent=11 // pred_check_branch
          %247 = sbr.rel (%p245) target = $region16
        $region15: #{tpu_custom_call.1} parent=11 // pred_region
          %p248 = scmp.lt.s32.totalorder %s33, 0
          %s249 = scalar_select %p248, %s33, 0
          %s250 = smul.addr %s249, 8
          %s251 = scalar_lea.vmem %s2, %s250
        $region16: #{tpu_custom_call.1} parent=11 // pred_fallthru
          _
        // Predicated region
        $region17: #{tpu_custom_call.1} parent=11 // pred_check
          %p252 = pneg %p83
        $region18: #{tpu_custom_call.1} parent=11 // pred_check_branch
          %254 = sbr.rel (%p252) target = $region20
        $region19: #{tpu_custom_call.1} parent=11 // pred_region
          _
        $region20: #{tpu_custom_call.1} parent=11 // pred_fallthru
          _
        // Predicated region
        $region21: #{tpu_custom_call.1} parent=11 // pred_check
          %p255 = pneg %p104
        $region22: #{tpu_custom_call.1} parent=11 // pred_check_branch
          %257 = sbr.rel (%p255) target = $region24
        $region23: #{tpu_custom_call.1} parent=11 // pred_region
          _
        $region24: #{tpu_custom_call.1} parent=11 // pred_fallthru
          _
        // Predicated region
        $region25: #{tpu_custom_call.1} parent=11 // pred_check
          %p258 = pneg %p181
        $region26: #{tpu_custom_call.1} parent=11 // pred_check_branch
          %260 = sbr.rel (%p258) target = $region28
        $region27: #{tpu_custom_call.1} parent=11 // pred_region
          _
        $region28: #{tpu_custom_call.1} parent=11 // pred_fallthru
          _
        // Predicated region
        $region29: #{tpu_custom_call.1} parent=11 // pred_check
          %p261 = pneg %p202
        $region30: #{tpu_custom_call.1} parent=11 // pred_check_branch
          %263 = sbr.rel (%p261) target = $region32
        $region31: #{tpu_custom_call.1} parent=11 // pred_region
          _
        $region32: #{tpu_custom_call.1} parent=11 // pred_fallthru
          _
      $region12: #{tpu_custom_call.1} parent=5 // pred_fallthru
        _
      %p264 = scmp.lt.s32.totalorder %s24, 2
      // Predicated region
      $region33: #{tpu_custom_call.1} parent=5 // pred_check
        %p265 = pneg %p264
      $region34: #{tpu_custom_call.1} parent=5 // pred_check_branch
        %267 = sbr.rel (%p265) target = $region36
      $region35: #{tpu_custom_call.1} parent=5 // pred_region
        // Predicated region
        $region37: #{tpu_custom_call.1} parent=35 // pred_check
          %p268 = pneg %p126
        $region38: #{tpu_custom_call.1} parent=35 // pred_check_branch
          %270 = sbr.rel (%p268) target = $region40
        $region39: #{tpu_custom_call.1} parent=35 // pred_region
          %p271 = scmp.lt.s32.totalorder %s32, 1
          %s272 = scalar_select %p271, %s32, 1
          %p273 = scmp.lt.s32.totalorder %s31, 0
          %s274 = scalar_select %p273, %s31, 0
          %s275 = sadd.s32 %s274, %s272
          %s276 = smul.addr %s275, 8
          %s277 = scalar_lea.vmem %s5, %s276
        $region40: #{tpu_custom_call.1} parent=35 // pred_fallthru
          _
        // Predicated region
        $region41: #{tpu_custom_call.1} parent=35 // pred_check
          %p278 = pneg %p154
        $region42: #{tpu_custom_call.1} parent=35 // pred_check_branch
          %280 = sbr.rel (%p278) target = $region44
        $region43: #{tpu_custom_call.1} parent=35 // pred_region
          %p281 = scmp.lt.s32.totalorder %s32, 1
          %s282 = scalar_select %p281, %s32, 1
          %p283 = scmp.lt.s32.totalorder %s31, 0
          %s284 = scalar_select %p283, %s31, 0
          %s285 = sadd.s32 %s284, %s282
          %s286 = smul.addr %s285, 8
          %s287 = scalar_lea.vmem %s6, %s286
        $region44: #{tpu_custom_call.1} parent=35 // pred_fallthru
          _
      $region36: #{tpu_custom_call.1} parent=5 // pred_fallthru
        _
      %p288 = scmp.le.s32.totalorder 1, %s24
      %p289 = scmp.lt.s32.totalorder %s24, 3
      %p290 = pnand %p288, %p289
      %p291 = pneg %p290
      // Predicated region
      $region45: #{tpu_custom_call.1} parent=5 // pred_check
        _
      $region46: #{tpu_custom_call.1} parent=5 // pred_check_branch
        %293 = sbr.rel (%p290) target = $region48
      $region47: #{tpu_custom_call.1} parent=5 // pred_region
        %s294 = ssub.s32 %s24, 1
        %p295 = scmp.lt.s32.totalorder %s33, 0
        %s296 = scalar_select %p295, %s33, 0
        %s297 = smul.addr %s296, 8
        %s298 = scalar_lea.vmem %s2, %s297
        %p299 = pneg %p62
        %p300 = pneg %p59
        %p301 = pneg %p83
        %p302 = pneg %p80
        %p303 = pneg %p104
        %p304 = pneg %p101
        %p305 = scmp.lt.s32.totalorder %s34, 1
        %s306 = scalar_select %p305, %s34, 1
        %p307 = scmp.lt.s32.totalorder %s33, 0
        %s308 = scalar_select %p307, %s33, 0
        %s309 = sadd.s32 %s308, %s306
        %s310 = smul.addr %s309, 8
        %s311 = scalar_lea.vmem %s5, %s310
        %p312 = pneg %p132
        %p313 = pneg %p129
        %p314 = scmp.lt.s32.totalorder %s34, 1
        %s315 = scalar_select %p314, %s34, 1
        %p316 = scmp.lt.s32.totalorder %s33, 0
        %s317 = scalar_select %p316, %s33, 0
        %s318 = sadd.s32 %s317, %s315
        %s319 = smul.addr %s318, 8
        %s320 = scalar_lea.vmem %s6, %s319
        %p321 = pneg %p160
        %p322 = pneg %p157
        %p323 = pneg %p181
        %p324 = pneg %p178
        %p325 = pneg %p202
        %p326 = pneg %p199
        %p327 = pneg %p230
        %p328 = pneg %p227
        %s329 = sand.u32 %s217, 1
        %s330 = scalar_lea.sflag [#allocation7], %s329
        %s331 = sand.u32 %s217, 1
        %s332 = smul.addr %s331, 8
        %s333 = scalar_lea.vmem [#allocation6], %s332
        %p334 = scmp.lt.s32.totalorder %s33, 0
        %s335 = scalar_select %p334, %s33, 0
        %s336 = smul.addr %s335, 8
        %s337 = scalar_lea.vmem %s2, %s336
        %p338 = scmp.lt.s32.totalorder %s34, 1
        %s339 = scalar_select %p338, %s34, 1
        %p340 = scmp.lt.s32.totalorder %s33, 0
        %s341 = scalar_select %p340, %s33, 0
        %s342 = sadd.s32 %s341, %s339
        %s343 = smul.addr %s342, 8
        %s344 = scalar_lea.vmem %s5, %s343
        %p345 = scmp.lt.s32.totalorder %s34, 1
        %s346 = scalar_select %p345, %s34, 1
        %p347 = scmp.lt.s32.totalorder %s33, 0
        %s348 = scalar_select %p347, %s33, 0
        %s349 = sadd.s32 %s348, %s346
        %s350 = smul.addr %s349, 8
        %s351 = scalar_lea.vmem %s6, %s350
        %s352 = smul.u32 %s33, 8
        %s353 = sadd.s32 %s352, 0
        %s354 = sshra.s32 %s353, 7
        %s355 = sand.u32 %s353, 127
        %s356 = sadd.s32 %s354, %s34
        %s357 = smul.u32 %s356, 128
        %s358 = sshra.s32 %s353, 7
        %s359 = sand.u32 %s353, 127
        %s360 = sadd.s32 %s357, %s359
        %s361 = sld [smem:[#allocation5 + %s360]]
        %s362 = scalar_lea.vmem %s1, %s361
        %p364 = scmp.lt.u32.totalorder 1, 8
        %p365 = pneg %p364
        // Predicated region
        $region49: #{tpu_custom_call.1} parent=47 // pred_check
          _
        $region50: #{tpu_custom_call.1} parent=47 // pred_check_branch
          %367 = sbr.rel (%p364) target = $region52
        $region51: #{tpu_custom_call.1} parent=47 // pred_region
          %s383 = sand.u32 1, 7
          %p384 = scmp.eq.s32.totalorder %s383, 0
          %p385 = pneg %p384
          // Predicated region
          $region64: #{tpu_custom_call.1} parent=51 // pred_check
            _
          $region65: #{tpu_custom_call.1} parent=51 // pred_check_branch
            %387 = sbr.rel (%p384) target = $region67
          $region66: #{tpu_custom_call.1} parent=51 // pred_region
            %s388 = sand.u32 1, 7
            %s389 = ssub.s32 1, %s388
            %s390 = scalar_lea.vmem %s362, %s389
            %s391 = ssub.s32 1, %s388
            %s392 = scalar_lea.vmem [#allocation2], %s391
            %s393 = sshll.u32 1, %s388
            %s394 = ssub.s32 %s393, 1
            loop: start=0, step=1, limit=1
            $region68: #{tpu_custom_call.1} parent=66 // loop_pre_header
              _
            $region69: #{tpu_custom_call.1} parent=66 // loop_header
              %s396 = sphi 0, %s400
              %p397 = scmp.ge.s32.totalorder %s396, 1
              %s401 = sphi %s390, %s390
              %s402 = sphi %s392, %s392
            $region70: #{tpu_custom_call.1} parent=66 // loop_header_branch
              %399 = sbr.rel (%p397) target = $region74
            $region71: #{tpu_custom_call.1} parent=66 // loop_body
              %v403 = vld [vmem:[%s401] sm:%s394]
              %404 = vst [vmem:[%s402] sm:%s394] %v403
            $region72: #{tpu_custom_call.1} parent=66 // loop_footer
              %s400 = sadd.s32 1, %s396
            $region73: #{tpu_custom_call.1} parent=66 // loop_footer_branch
              %395 = sbr.rel target = $region69
            $region74: #{tpu_custom_call.1} parent=66 // loop_exit
              _
          $region67: #{tpu_custom_call.1} parent=51 // pred_fallthru
            _
        $region52: #{tpu_custom_call.1} parent=47 // pred_fallthru
          _
        // Predicated region
        $region53: #{tpu_custom_call.1} parent=47 // pred_check
          %p368 = pneg %p364
        $region54: #{tpu_custom_call.1} parent=47 // pred_check_branch
          %370 = sbr.rel (%p368) target = $region56
        $region55: #{tpu_custom_call.1} parent=47 // pred_region
          %s371 = sshll.u32 1, 1
          %s372 = ssub.s32 %s371, 1
          loop: start=0, step=1, limit=1
          $region57: #{tpu_custom_call.1} parent=55 // loop_pre_header
            _
          $region58: #{tpu_custom_call.1} parent=55 // loop_header
            %s374 = sphi 0, %s378
            %p375 = scmp.ge.s32.totalorder %s374, 1
            %s379 = sphi %s362, %s362
            %s380 = sphi [#allocation2], [#allocation2]
          $region59: #{tpu_custom_call.1} parent=55 // loop_header_branch
            %377 = sbr.rel (%p375) target = $region63
          $region60: #{tpu_custom_call.1} parent=55 // loop_body
            %v381 = vld [vmem:[%s379] sm:%s372]
            %382 = vst [vmem:[%s380] sm:%s372] %v381
          $region61: #{tpu_custom_call.1} parent=55 // loop_footer
            %s378 = sadd.s32 1, %s374
          $region62: #{tpu_custom_call.1} parent=55 // loop_footer_branch
            %373 = sbr.rel target = $region58
          $region63: #{tpu_custom_call.1} parent=55 // loop_exit
            _
        $region56: #{tpu_custom_call.1} parent=47 // pred_fallthru
          _
        // Predicated region
        $region75: #{tpu_custom_call.1} parent=47 // pred_check
          _
        $region76: #{tpu_custom_call.1} parent=47 // pred_check_branch
          %407 = sbr.rel (0) target = $region78
        $region77: #{tpu_custom_call.1} parent=47 // pred_region
          %408 = vsyncadd [#allocation3], 16
        $region78: #{tpu_custom_call.1} parent=47 // pred_fallthru
          _
        %s409 = sadd.s32 0, 1
        %s410 = sadd.s32 %s352, %s409
        %s411 = sshra.s32 %s410, 7
        %s412 = sand.u32 %s410, 127
        %s413 = sadd.s32 %s411, %s34
        %s414 = smul.u32 %s413, 128
        %s415 = sshra.s32 %s410, 7
        %s416 = sand.u32 %s410, 127
        %s417 = sadd.s32 %s414, %s416
        %s418 = sld [smem:[#allocation5 + %s417]]
        %s419 = scalar_lea.vmem %s1, %s418
        %s420 = scalar_lea.vmem [#allocation2], %s409
        %p422 = scmp.lt.u32.totalorder 1, 8
        %p423 = pneg %p422
        // Predicated region
        $region79: #{tpu_custom_call.1} parent=47 // pred_check
          _
        $region80: #{tpu_custom_call.1} parent=47 // pred_check_branch
          %425 = sbr.rel (%p422) target = $region82
        $region81: #{tpu_custom_call.1} parent=47 // pred_region
          %s441 = sand.u32 1, 7
          %p442 = scmp.eq.s32.totalorder %s441, 0
          %p443 = pneg %p442
          // Predicated region
          $region94: #{tpu_custom_call.1} parent=81 // pred_check
            _
          $region95: #{tpu_custom_call.1} parent=81 // pred_check_branch
            %445 = sbr.rel (%p442) target = $region97
          $region96: #{tpu_custom_call.1} parent=81 // pred_region
            %s446 = sand.u32 1, 7
            %s447 = ssub.s32 1, %s446
            %s448 = scalar_lea.vmem %s419, %s447
            %s449 = ssub.s32 1, %s446
            %s450 = scalar_lea.vmem %s420, %s449 [#allocation2]
            %s451 = sshll.u32 1, %s446
            %s452 = ssub.s32 %s451, 1
            loop: start=0, step=1, limit=1
            $region98: #{tpu_custom_call.1} parent=96 // loop_pre_header
              _
            $region99: #{tpu_custom_call.1} parent=96 // loop_header
              %s454 = sphi 0, %s458
              %p455 = scmp.ge.s32.totalorder %s454, 1
              %s459 = sphi %s448, %s448
              %s460 = sphi %s450, %s450
            $region100: #{tpu_custom_call.1} parent=96 // loop_header_branch
              %457 = sbr.rel (%p455) target = $region104
            $region101: #{tpu_custom_call.1} parent=96 // loop_body
              %v461 = vld [vmem:[%s459] sm:%s452]
              %462 = vst [vmem:[%s460] sm:%s452] %v461
            $region102: #{tpu_custom_call.1} parent=96 // loop_footer
              %s458 = sadd.s32 1, %s454
            $region103: #{tpu_custom_call.1} parent=96 // loop_footer_branch
              %453 = sbr.rel target = $region99
            $region104: #{tpu_custom_call.1} parent=96 // loop_exit
              _
          $region97: #{tpu_custom_call.1} parent=81 // pred_fallthru
            _
        $region82: #{tpu_custom_call.1} parent=47 // pred_fallthru
          _
        // Predicated region
        $region83: #{tpu_custom_call.1} parent=47 // pred_check
          %p426 = pneg %p422
        $region84: #{tpu_custom_call.1} parent=47 // pred_check_branch
          %428 = sbr.rel (%p426) target = $region86
        $region85: #{tpu_custom_call.1} parent=47 // pred_region
          %s429 = sshll.u32 1, 1
          %s430 = ssub.s32 %s429, 1
          loop: start=0, step=1, limit=1
          $region87: #{tpu_custom_call.1} parent=85 // loop_pre_header
            _
          $region88: #{tpu_custom_call.1} parent=85 // loop_header
            %s432 = sphi 0, %s436
            %p433 = scmp.ge.s32.totalorder %s432, 1
            %s437 = sphi %s419, %s419
            %s438 = sphi %s420, %s420
          $region89: #{tpu_custom_call.1} parent=85 // loop_header_branch
            %435 = sbr.rel (%p433) target = $region93
          $region90: #{tpu_custom_call.1} parent=85 // loop_body
            %v439 = vld [vmem:[%s437] sm:%s430]
            %440 = vst [vmem:[%s438] sm:%s430] %v439
          $region91: #{tpu_custom_call.1} parent=85 // loop_footer
            %s436 = sadd.s32 1, %s432
          $region92: #{tpu_custom_call.1} parent=85 // loop_footer_branch
            %431 = sbr.rel target = $region88
          $region93: #{tpu_custom_call.1} parent=85 // loop_exit
            _
        $region86: #{tpu_custom_call.1} parent=47 // pred_fallthru
          _
        // Predicated region
        $region105: #{tpu_custom_call.1} parent=47 // pred_check
          _
        $region106: #{tpu_custom_call.1} parent=47 // pred_check_branch
          %465 = sbr.rel (0) target = $region108
        $region107: #{tpu_custom_call.1} parent=47 // pred_region
          %466 = vsyncadd [#allocation3], 16
        $region108: #{tpu_custom_call.1} parent=47 // pred_fallthru
          _
        %s467 = sadd.s32 0, 2
        %s468 = sadd.s32 %s352, %s467
        %s469 = sshra.s32 %s468, 7
        %s470 = sand.u32 %s468, 127
        %s471 = sadd.s32 %s469, %s34
        %s472 = smul.u32 %s471, 128
        %s473 = sshra.s32 %s468, 7
        %s474 = sand.u32 %s468, 127
        %s475 = sadd.s32 %s472, %s474
        %s476 = sld [smem:[#allocation5 + %s475]]
        %s477 = scalar_lea.vmem %s1, %s476
        %s478 = scalar_lea.vmem [#allocation2], %s467
        %p480 = scmp.lt.u32.totalorder 1, 8
        %p481 = pneg %p480
        // Predicated region
        $region109: #{tpu_custom_call.1} parent=47 // pred_check
          _
        $region110: #{tpu_custom_call.1} parent=47 // pred_check_branch
          %483 = sbr.rel (%p480) target = $region112
        $region111: #{tpu_custom_call.1} parent=47 // pred_region
          %s499 = sand.u32 1, 7
          %p500 = scmp.eq.s32.totalorder %s499, 0
          %p501 = pneg %p500
          // Predicated region
          $region124: #{tpu_custom_call.1} parent=111 // pred_check
            _
          $region125: #{tpu_custom_call.1} parent=111 // pred_check_branch
            %503 = sbr.rel (%p500) target = $region127
          $region126: #{tpu_custom_call.1} parent=111 // pred_region
            %s504 = sand.u32 1, 7
            %s505 = ssub.s32 1, %s504
            %s506 = scalar_lea.vmem %s477, %s505
            %s507 = ssub.s32 1, %s504
            %s508 = scalar_lea.vmem %s478, %s507 [#allocation2]
            %s509 = sshll.u32 1, %s504
            %s510 = ssub.s32 %s509, 1
            loop: start=0, step=1, limit=1
            $region128: #{tpu_custom_call.1} parent=126 // loop_pre_header
              _
            $region129: #{tpu_custom_call.1} parent=126 // loop_header
              %s512 = sphi 0, %s516
              %p513 = scmp.ge.s32.totalorder %s512, 1
              %s517 = sphi %s506, %s506
              %s518 = sphi %s508, %s508
            $region130: #{tpu_custom_call.1} parent=126 // loop_header_branch
              %515 = sbr.rel (%p513) target = $region134
            $region131: #{tpu_custom_call.1} parent=126 // loop_body
              %v519 = vld [vmem:[%s517] sm:%s510]
              %520 = vst [vmem:[%s518] sm:%s510] %v519
            $region132: #{tpu_custom_call.1} parent=126 // loop_footer
              %s516 = sadd.s32 1, %s512
            $region133: #{tpu_custom_call.1} parent=126 // loop_footer_branch
              %511 = sbr.rel target = $region129
            $region134: #{tpu_custom_call.1} parent=126 // loop_exit
              _
          $region127: #{tpu_custom_call.1} parent=111 // pred_fallthru
            _
        $region112: #{tpu_custom_call.1} parent=47 // pred_fallthru
          _
        // Predicated region
        $region113: #{tpu_custom_call.1} parent=47 // pred_check
          %p484 = pneg %p480
        $region114: #{tpu_custom_call.1} parent=47 // pred_check_branch
          %486 = sbr.rel (%p484) target = $region116
        $region115: #{tpu_custom_call.1} parent=47 // pred_region
          %s487 = sshll.u32 1, 1
          %s488 = ssub.s32 %s487, 1
          loop: start=0, step=1, limit=1
          $region117: #{tpu_custom_call.1} parent=115 // loop_pre_header
            _
          $region118: #{tpu_custom_call.1} parent=115 // loop_header
            %s490 = sphi 0, %s494
            %p491 = scmp.ge.s32.totalorder %s490, 1
            %s495 = sphi %s477, %s477
            %s496 = sphi %s478, %s478
          $region119: #{tpu_custom_call.1} parent=115 // loop_header_branch
            %493 = sbr.rel (%p491) target = $region123
          $region120: #{tpu_custom_call.1} parent=115 // loop_body
            %v497 = vld [vmem:[%s495] sm:%s488]
            %498 = vst [vmem:[%s496] sm:%s488] %v497
          $region121: #{tpu_custom_call.1} parent=115 // loop_footer
            %s494 = sadd.s32 1, %s490
          $region122: #{tpu_custom_call.1} parent=115 // loop_footer_branch
            %489 = sbr.rel target = $region118
          $region123: #{tpu_custom_call.1} parent=115 // loop_exit
            _
        $region116: #{tpu_custom_call.1} parent=47 // pred_fallthru
          _
        // Predicated region
        $region135: #{tpu_custom_call.1} parent=47 // pred_check
          _
        $region136: #{tpu_custom_call.1} parent=47 // pred_check_branch
          %523 = sbr.rel (0) target = $region138
        $region137: #{tpu_custom_call.1} parent=47 // pred_region
          %524 = vsyncadd [#allocation3], 16
        $region138: #{tpu_custom_call.1} parent=47 // pred_fallthru
          _
        %s525 = sadd.s32 0, 3
        %s526 = sadd.s32 %s352, %s525
        %s527 = sshra.s32 %s526, 7
        %s528 = sand.u32 %s526, 127
        %s529 = sadd.s32 %s527, %s34
        %s530 = smul.u32 %s529, 128
        %s531 = sshra.s32 %s526, 7
        %s532 = sand.u32 %s526, 127
        %s533 = sadd.s32 %s530, %s532
        %s534 = sld [smem:[#allocation5 + %s533]]
        %s535 = scalar_lea.vmem %s1, %s534
        %s536 = scalar_lea.vmem [#allocation2], %s525
        %p538 = scmp.lt.u32.totalorder 1, 8
        %p539 = pneg %p538
        // Predicated region
        $region139: #{tpu_custom_call.1} parent=47 // pred_check
          _
        $region140: #{tpu_custom_call.1} parent=47 // pred_check_branch
          %541 = sbr.rel (%p538) target = $region142
        $region141: #{tpu_custom_call.1} parent=47 // pred_region
          %s557 = sand.u32 1, 7
          %p558 = scmp.eq.s32.totalorder %s557, 0
          %p559 = pneg %p558
          // Predicated region
          $region154: #{tpu_custom_call.1} parent=141 // pred_check
            _
          $region155: #{tpu_custom_call.1} parent=141 // pred_check_branch
            %561 = sbr.rel (%p558) target = $region157
          $region156: #{tpu_custom_call.1} parent=141 // pred_region
            %s562 = sand.u32 1, 7
            %s563 = ssub.s32 1, %s562
            %s564 = scalar_lea.vmem %s535, %s563
            %s565 = ssub.s32 1, %s562
            %s566 = scalar_lea.vmem %s536, %s565 [#allocation2]
            %s567 = sshll.u32 1, %s562
            %s568 = ssub.s32 %s567, 1
            loop: start=0, step=1, limit=1
            $region158: #{tpu_custom_call.1} parent=156 // loop_pre_header
              _
            $region159: #{tpu_custom_call.1} parent=156 // loop_header
              %s570 = sphi 0, %s574
              %p571 = scmp.ge.s32.totalorder %s570, 1
              %s575 = sphi %s564, %s564
              %s576 = sphi %s566, %s566
            $region160: #{tpu_custom_call.1} parent=156 // loop_header_branch
              %573 = sbr.rel (%p571) target = $region164
            $region161: #{tpu_custom_call.1} parent=156 // loop_body
              %v577 = vld [vmem:[%s575] sm:%s568]
              %578 = vst [vmem:[%s576] sm:%s568] %v577
            $region162: #{tpu_custom_call.1} parent=156 // loop_footer
              %s574 = sadd.s32 1, %s570
            $region163: #{tpu_custom_call.1} parent=156 // loop_footer_branch
              %569 = sbr.rel target = $region159
            $region164: #{tpu_custom_call.1} parent=156 // loop_exit
              _
          $region157: #{tpu_custom_call.1} parent=141 // pred_fallthru
            _
        $region142: #{tpu_custom_call.1} parent=47 // pred_fallthru
          _
        // Predicated region
        $region143: #{tpu_custom_call.1} parent=47 // pred_check
          %p542 = pneg %p538
        $region144: #{tpu_custom_call.1} parent=47 // pred_check_branch
          %544 = sbr.rel (%p542) target = $region146
        $region145: #{tpu_custom_call.1} parent=47 // pred_region
          %s545 = sshll.u32 1, 1
          %s546 = ssub.s32 %s545, 1
          loop: start=0, step=1, limit=1
          $region147: #{tpu_custom_call.1} parent=145 // loop_pre_header
            _
          $region148: #{tpu_custom_call.1} parent=145 // loop_header
            %s548 = sphi 0, %s552
            %p549 = scmp.ge.s32.totalorder %s548, 1
            %s553 = sphi %s535, %s535
            %s554 = sphi %s536, %s536
          $region149: #{tpu_custom_call.1} parent=145 // loop_header_branch
            %551 = sbr.rel (%p549) target = $region153
          $region150: #{tpu_custom_call.1} parent=145 // loop_body
            %v555 = vld [vmem:[%s553] sm:%s546]
            %556 = vst [vmem:[%s554] sm:%s546] %v555
          $region151: #{tpu_custom_call.1} parent=145 // loop_footer
            %s552 = sadd.s32 1, %s548
          $region152: #{tpu_custom_call.1} parent=145 // loop_footer_branch
            %547 = sbr.rel target = $region148
          $region153: #{tpu_custom_call.1} parent=145 // loop_exit
            _
        $region146: #{tpu_custom_call.1} parent=47 // pred_fallthru
          _
        // Predicated region
        $region165: #{tpu_custom_call.1} parent=47 // pred_check
          _
        $region166: #{tpu_custom_call.1} parent=47 // pred_check_branch
          %581 = sbr.rel (0) target = $region168
        $region167: #{tpu_custom_call.1} parent=47 // pred_region
          %582 = vsyncadd [#allocation3], 16
        $region168: #{tpu_custom_call.1} parent=47 // pred_fallthru
          _
        %s583 = sadd.s32 0, 4
        %s584 = sadd.s32 %s352, %s583
        %s585 = sshra.s32 %s584, 7
        %s586 = sand.u32 %s584, 127
        %s587 = sadd.s32 %s585, %s34
        %s588 = smul.u32 %s587, 128
        %s589 = sshra.s32 %s584, 7
        %s590 = sand.u32 %s584, 127
        %s591 = sadd.s32 %s588, %s590
        %s592 = sld [smem:[#allocation5 + %s591]]
        %s593 = scalar_lea.vmem %s1, %s592
        %s594 = scalar_lea.vmem [#allocation2], %s583
        %p596 = scmp.lt.u32.totalorder 1, 8
        %p597 = pneg %p596
        // Predicated region
        $region169: #{tpu_custom_call.1} parent=47 // pred_check
          _
        $region170: #{tpu_custom_call.1} parent=47 // pred_check_branch
          %599 = sbr.rel (%p596) target = $region172
        $region171: #{tpu_custom_call.1} parent=47 // pred_region
          %s615 = sand.u32 1, 7
          %p616 = scmp.eq.s32.totalorder %s615, 0
          %p617 = pneg %p616
          // Predicated region
          $region184: #{tpu_custom_call.1} parent=171 // pred_check
            _
          $region185: #{tpu_custom_call.1} parent=171 // pred_check_branch
            %619 = sbr.rel (%p616) target = $region187
          $region186: #{tpu_custom_call.1} parent=171 // pred_region
            %s620 = sand.u32 1, 7
            %s621 = ssub.s32 1, %s620
            %s622 = scalar_lea.vmem %s593, %s621
            %s623 = ssub.s32 1, %s620
            %s624 = scalar_lea.vmem %s594, %s623 [#allocation2]
            %s625 = sshll.u32 1, %s620
            %s626 = ssub.s32 %s625, 1
            loop: start=0, step=1, limit=1
            $region188: #{tpu_custom_call.1} parent=186 // loop_pre_header
              _
            $region189: #{tpu_custom_call.1} parent=186 // loop_header
              %s628 = sphi 0, %s632
              %p629 = scmp.ge.s32.totalorder %s628, 1
              %s633 = sphi %s622, %s622
              %s634 = sphi %s624, %s624
            $region190: #{tpu_custom_call.1} parent=186 // loop_header_branch
              %631 = sbr.rel (%p629) target = $region194
            $region191: #{tpu_custom_call.1} parent=186 // loop_body
              %v635 = vld [vmem:[%s633] sm:%s626]
              %636 = vst [vmem:[%s634] sm:%s626] %v635
            $region192: #{tpu_custom_call.1} parent=186 // loop_footer
              %s632 = sadd.s32 1, %s628
            $region193: #{tpu_custom_call.1} parent=186 // loop_footer_branch
              %627 = sbr.rel target = $region189
            $region194: #{tpu_custom_call.1} parent=186 // loop_exit
              _
          $region187: #{tpu_custom_call.1} parent=171 // pred_fallthru
            _
        $region172: #{tpu_custom_call.1} parent=47 // pred_fallthru
          _
        // Predicated region
        $region173: #{tpu_custom_call.1} parent=47 // pred_check
          %p600 = pneg %p596
        $region174: #{tpu_custom_call.1} parent=47 // pred_check_branch
          %602 = sbr.rel (%p600) target = $region176
        $region175: #{tpu_custom_call.1} parent=47 // pred_region
          %s603 = sshll.u32 1, 1
          %s604 = ssub.s32 %s603, 1
          loop: start=0, step=1, limit=1
          $region177: #{tpu_custom_call.1} parent=175 // loop_pre_header
            _
          $region178: #{tpu_custom_call.1} parent=175 // loop_header
            %s606 = sphi 0, %s610
            %p607 = scmp.ge.s32.totalorder %s606, 1
            %s611 = sphi %s593, %s593
            %s612 = sphi %s594, %s594
          $region179: #{tpu_custom_call.1} parent=175 // loop_header_branch
            %609 = sbr.rel (%p607) target = $region183
          $region180: #{tpu_custom_call.1} parent=175 // loop_body
            %v613 = vld [vmem:[%s611] sm:%s604]
            %614 = vst [vmem:[%s612] sm:%s604] %v613
          $region181: #{tpu_custom_call.1} parent=175 // loop_footer
            %s610 = sadd.s32 1, %s606
          $region182: #{tpu_custom_call.1} parent=175 // loop_footer_branch
            %605 = sbr.rel target = $region178
          $region183: #{tpu_custom_call.1} parent=175 // loop_exit
            _
        $region176: #{tpu_custom_call.1} parent=47 // pred_fallthru
          _
        // Predicated region
        $region195: #{tpu_custom_call.1} parent=47 // pred_check
          _
        $region196: #{tpu_custom_call.1} parent=47 // pred_check_branch
          %639 = sbr.rel (0) target = $region198
        $region197: #{tpu_custom_call.1} parent=47 // pred_region
          %640 = vsyncadd [#allocation3], 16
        $region198: #{tpu_custom_call.1} parent=47 // pred_fallthru
          _
        %s641 = sadd.s32 0, 5
        %s642 = sadd.s32 %s352, %s641
        %s643 = sshra.s32 %s642, 7
        %s644 = sand.u32 %s642, 127
        %s645 = sadd.s32 %s643, %s34
        %s646 = smul.u32 %s645, 128
        %s647 = sshra.s32 %s642, 7
        %s648 = sand.u32 %s642, 127
        %s649 = sadd.s32 %s646, %s648
        %s650 = sld [smem:[#allocation5 + %s649]]
        %s651 = scalar_lea.vmem %s1, %s650
        %s652 = scalar_lea.vmem [#allocation2], %s641
        %p654 = scmp.lt.u32.totalorder 1, 8
        %p655 = pneg %p654
        // Predicated region
        $region199: #{tpu_custom_call.1} parent=47 // pred_check
          _
        $region200: #{tpu_custom_call.1} parent=47 // pred_check_branch
          %657 = sbr.rel (%p654) target = $region202
        $region201: #{tpu_custom_call.1} parent=47 // pred_region
          %s673 = sand.u32 1, 7
          %p674 = scmp.eq.s32.totalorder %s673, 0
          %p675 = pneg %p674
          // Predicated region
          $region214: #{tpu_custom_call.1} parent=201 // pred_check
            _
          $region215: #{tpu_custom_call.1} parent=201 // pred_check_branch
            %677 = sbr.rel (%p674) target = $region217
          $region216: #{tpu_custom_call.1} parent=201 // pred_region
            %s678 = sand.u32 1, 7
            %s679 = ssub.s32 1, %s678
            %s680 = scalar_lea.vmem %s651, %s679
            %s681 = ssub.s32 1, %s678
            %s682 = scalar_lea.vmem %s652, %s681 [#allocation2]
            %s683 = sshll.u32 1, %s678
            %s684 = ssub.s32 %s683, 1
            loop: start=0, step=1, limit=1
            $region218: #{tpu_custom_call.1} parent=216 // loop_pre_header
              _
            $region219: #{tpu_custom_call.1} parent=216 // loop_header
              %s686 = sphi 0, %s690
              %p687 = scmp.ge.s32.totalorder %s686, 1
              %s691 = sphi %s680, %s680
              %s692 = sphi %s682, %s682
            $region220: #{tpu_custom_call.1} parent=216 // loop_header_branch
              %689 = sbr.rel (%p687) target = $region224
            $region221: #{tpu_custom_call.1} parent=216 // loop_body
              %v693 = vld [vmem:[%s691] sm:%s684]
              %694 = vst [vmem:[%s692] sm:%s684] %v693
            $region222: #{tpu_custom_call.1} parent=216 // loop_footer
              %s690 = sadd.s32 1, %s686
            $region223: #{tpu_custom_call.1} parent=216 // loop_footer_branch
              %685 = sbr.rel target = $region219
            $region224: #{tpu_custom_call.1} parent=216 // loop_exit
              _
          $region217: #{tpu_custom_call.1} parent=201 // pred_fallthru
            _
        $region202: #{tpu_custom_call.1} parent=47 // pred_fallthru
          _
        // Predicated region
        $region203: #{tpu_custom_call.1} parent=47 // pred_check
          %p658 = pneg %p654
        $region204: #{tpu_custom_call.1} parent=47 // pred_check_branch
          %660 = sbr.rel (%p658) target = $region206
        $region205: #{tpu_custom_call.1} parent=47 // pred_region
          %s661 = sshll.u32 1, 1
          %s662 = ssub.s32 %s661, 1
          loop: start=0, step=1, limit=1
          $region207: #{tpu_custom_call.1} parent=205 // loop_pre_header
            _
          $region208: #{tpu_custom_call.1} parent=205 // loop_header
            %s664 = sphi 0, %s668
            %p665 = scmp.ge.s32.totalorder %s664, 1
            %s669 = sphi %s651, %s651
            %s670 = sphi %s652, %s652
          $region209: #{tpu_custom_call.1} parent=205 // loop_header_branch
            %667 = sbr.rel (%p665) target = $region213
          $region210: #{tpu_custom_call.1} parent=205 // loop_body
            %v671 = vld [vmem:[%s669] sm:%s662]
            %672 = vst [vmem:[%s670] sm:%s662] %v671
          $region211: #{tpu_custom_call.1} parent=205 // loop_footer
            %s668 = sadd.s32 1, %s664
          $region212: #{tpu_custom_call.1} parent=205 // loop_footer_branch
            %663 = sbr.rel target = $region208
          $region213: #{tpu_custom_call.1} parent=205 // loop_exit
            _
        $region206: #{tpu_custom_call.1} parent=47 // pred_fallthru
          _
        // Predicated region
        $region225: #{tpu_custom_call.1} parent=47 // pred_check
          _
        $region226: #{tpu_custom_call.1} parent=47 // pred_check_branch
          %697 = sbr.rel (0) target = $region228
        $region227: #{tpu_custom_call.1} parent=47 // pred_region
          %698 = vsyncadd [#allocation3], 16
        $region228: #{tpu_custom_call.1} parent=47 // pred_fallthru
          _
        %s699 = sadd.s32 0, 6
        %s700 = sadd.s32 %s352, %s699
        %s701 = sshra.s32 %s700, 7
        %s702 = sand.u32 %s700, 127
        %s703 = sadd.s32 %s701, %s34
        %s704 = smul.u32 %s703, 128
        %s705 = sshra.s32 %s700, 7
        %s706 = sand.u32 %s700, 127
        %s707 = sadd.s32 %s704, %s706
        %s708 = sld [smem:[#allocation5 + %s707]]
        %s709 = scalar_lea.vmem %s1, %s708
        %s710 = scalar_lea.vmem [#allocation2], %s699
        %p712 = scmp.lt.u32.totalorder 1, 8
        %p713 = pneg %p712
        // Predicated region
        $region229: #{tpu_custom_call.1} parent=47 // pred_check
          _
        $region230: #{tpu_custom_call.1} parent=47 // pred_check_branch
          %715 = sbr.rel (%p712) target = $region232
        $region231: #{tpu_custom_call.1} parent=47 // pred_region
          %s731 = sand.u32 1, 7
          %p732 = scmp.eq.s32.totalorder %s731, 0
          %p733 = pneg %p732
          // Predicated region
          $region244: #{tpu_custom_call.1} parent=231 // pred_check
            _
          $region245: #{tpu_custom_call.1} parent=231 // pred_check_branch
            %735 = sbr.rel (%p732) target = $region247
          $region246: #{tpu_custom_call.1} parent=231 // pred_region
            %s736 = sand.u32 1, 7
            %s737 = ssub.s32 1, %s736
            %s738 = scalar_lea.vmem %s709, %s737
            %s739 = ssub.s32 1, %s736
            %s740 = scalar_lea.vmem %s710, %s739 [#allocation2]
            %s741 = sshll.u32 1, %s736
            %s742 = ssub.s32 %s741, 1
            loop: start=0, step=1, limit=1
            $region248: #{tpu_custom_call.1} parent=246 // loop_pre_header
              _
            $region249: #{tpu_custom_call.1} parent=246 // loop_header
              %s744 = sphi 0, %s748
              %p745 = scmp.ge.s32.totalorder %s744, 1
              %s749 = sphi %s738, %s738
              %s750 = sphi %s740, %s740
            $region250: #{tpu_custom_call.1} parent=246 // loop_header_branch
              %747 = sbr.rel (%p745) target = $region254
            $region251: #{tpu_custom_call.1} parent=246 // loop_body
              %v751 = vld [vmem:[%s749] sm:%s742]
              %752 = vst [vmem:[%s750] sm:%s742] %v751
            $region252: #{tpu_custom_call.1} parent=246 // loop_footer
              %s748 = sadd.s32 1, %s744
            $region253: #{tpu_custom_call.1} parent=246 // loop_footer_branch
              %743 = sbr.rel target = $region249
            $region254: #{tpu_custom_call.1} parent=246 // loop_exit
              _
          $region247: #{tpu_custom_call.1} parent=231 // pred_fallthru
            _
        $region232: #{tpu_custom_call.1} parent=47 // pred_fallthru
          _
        // Predicated region
        $region233: #{tpu_custom_call.1} parent=47 // pred_check
          %p716 = pneg %p712
        $region234: #{tpu_custom_call.1} parent=47 // pred_check_branch
          %718 = sbr.rel (%p716) target = $region236
        $region235: #{tpu_custom_call.1} parent=47 // pred_region
          %s719 = sshll.u32 1, 1
          %s720 = ssub.s32 %s719, 1
          loop: start=0, step=1, limit=1
          $region237: #{tpu_custom_call.1} parent=235 // loop_pre_header
            _
          $region238: #{tpu_custom_call.1} parent=235 // loop_header
            %s722 = sphi 0, %s726
            %p723 = scmp.ge.s32.totalorder %s722, 1
            %s727 = sphi %s709, %s709
            %s728 = sphi %s710, %s710
          $region239: #{tpu_custom_call.1} parent=235 // loop_header_branch
            %725 = sbr.rel (%p723) target = $region243
          $region240: #{tpu_custom_call.1} parent=235 // loop_body
            %v729 = vld [vmem:[%s727] sm:%s720]
            %730 = vst [vmem:[%s728] sm:%s720] %v729
          $region241: #{tpu_custom_call.1} parent=235 // loop_footer
            %s726 = sadd.s32 1, %s722
          $region242: #{tpu_custom_call.1} parent=235 // loop_footer_branch
            %721 = sbr.rel target = $region238
          $region243: #{tpu_custom_call.1} parent=235 // loop_exit
            _
        $region236: #{tpu_custom_call.1} parent=47 // pred_fallthru
          _
        // Predicated region
        $region255: #{tpu_custom_call.1} parent=47 // pred_check
          _
        $region256: #{tpu_custom_call.1} parent=47 // pred_check_branch
          %755 = sbr.rel (0) target = $region258
        $region257: #{tpu_custom_call.1} parent=47 // pred_region
          %756 = vsyncadd [#allocation3], 16
        $region258: #{tpu_custom_call.1} parent=47 // pred_fallthru
          _
        %s757 = sadd.s32 0, 7
        %s758 = sadd.s32 %s352, %s757
        %s759 = sshra.s32 %s758, 7
        %s760 = sand.u32 %s758, 127
        %s761 = sadd.s32 %s759, %s34
        %s762 = smul.u32 %s761, 128
        %s763 = sshra.s32 %s758, 7
        %s764 = sand.u32 %s758, 127
        %s765 = sadd.s32 %s762, %s764
        %s766 = sld [smem:[#allocation5 + %s765]]
        %s767 = scalar_lea.vmem %s1, %s766
        %s768 = scalar_lea.vmem [#allocation2], %s757
        %p770 = scmp.lt.u32.totalorder 1, 8
        %p771 = pneg %p770
        // Predicated region
        $region259: #{tpu_custom_call.1} parent=47 // pred_check
          _
        $region260: #{tpu_custom_call.1} parent=47 // pred_check_branch
          %773 = sbr.rel (%p770) target = $region262
        $region261: #{tpu_custom_call.1} parent=47 // pred_region
          %s789 = sand.u32 1, 7
          %p790 = scmp.eq.s32.totalorder %s789, 0
          %p791 = pneg %p790
          // Predicated region
          $region274: #{tpu_custom_call.1} parent=261 // pred_check
            _
          $region275: #{tpu_custom_call.1} parent=261 // pred_check_branch
            %793 = sbr.rel (%p790) target = $region277
          $region276: #{tpu_custom_call.1} parent=261 // pred_region
            %s794 = sand.u32 1, 7
            %s795 = ssub.s32 1, %s794
            %s796 = scalar_lea.vmem %s767, %s795
            %s797 = ssub.s32 1, %s794
            %s798 = scalar_lea.vmem %s768, %s797 [#allocation2]
            %s799 = sshll.u32 1, %s794
            %s800 = ssub.s32 %s799, 1
            loop: start=0, step=1, limit=1
            $region278: #{tpu_custom_call.1} parent=276 // loop_pre_header
              _
            $region279: #{tpu_custom_call.1} parent=276 // loop_header
              %s802 = sphi 0, %s806
              %p803 = scmp.ge.s32.totalorder %s802, 1
              %s807 = sphi %s796, %s796
              %s808 = sphi %s798, %s798
            $region280: #{tpu_custom_call.1} parent=276 // loop_header_branch
              %805 = sbr.rel (%p803) target = $region284
            $region281: #{tpu_custom_call.1} parent=276 // loop_body
              %v809 = vld [vmem:[%s807] sm:%s800]
              %810 = vst [vmem:[%s808] sm:%s800] %v809
            $region282: #{tpu_custom_call.1} parent=276 // loop_footer
              %s806 = sadd.s32 1, %s802
            $region283: #{tpu_custom_call.1} parent=276 // loop_footer_branch
              %801 = sbr.rel target = $region279
            $region284: #{tpu_custom_call.1} parent=276 // loop_exit
              _
          $region277: #{tpu_custom_call.1} parent=261 // pred_fallthru
            _
        $region262: #{tpu_custom_call.1} parent=47 // pred_fallthru
          _
        // Predicated region
        $region263: #{tpu_custom_call.1} parent=47 // pred_check
          %p774 = pneg %p770
        $region264: #{tpu_custom_call.1} parent=47 // pred_check_branch
          %776 = sbr.rel (%p774) target = $region266
        $region265: #{tpu_custom_call.1} parent=47 // pred_region
          %s777 = sshll.u32 1, 1
          %s778 = ssub.s32 %s777, 1
          loop: start=0, step=1, limit=1
          $region267: #{tpu_custom_call.1} parent=265 // loop_pre_header
            _
          $region268: #{tpu_custom_call.1} parent=265 // loop_header
            %s780 = sphi 0, %s784
            %p781 = scmp.ge.s32.totalorder %s780, 1
            %s785 = sphi %s767, %s767
            %s786 = sphi %s768, %s768
          $region269: #{tpu_custom_call.1} parent=265 // loop_header_branch
            %783 = sbr.rel (%p781) target = $region273
          $region270: #{tpu_custom_call.1} parent=265 // loop_body
            %v787 = vld [vmem:[%s785] sm:%s778]
            %788 = vst [vmem:[%s786] sm:%s778] %v787
          $region271: #{tpu_custom_call.1} parent=265 // loop_footer
            %s784 = sadd.s32 1, %s780
          $region272: #{tpu_custom_call.1} parent=265 // loop_footer_branch
            %779 = sbr.rel target = $region268
          $region273: #{tpu_custom_call.1} parent=265 // loop_exit
            _
        $region266: #{tpu_custom_call.1} parent=47 // pred_fallthru
          _
        // Predicated region
        $region285: #{tpu_custom_call.1} parent=47 // pred_check
          _
        $region286: #{tpu_custom_call.1} parent=47 // pred_check_branch
          %813 = sbr.rel (0) target = $region288
        $region287: #{tpu_custom_call.1} parent=47 // pred_region
          %814 = vsyncadd [#allocation3], 16
        $region288: #{tpu_custom_call.1} parent=47 // pred_fallthru
          _
        %v815 = vld [vmem:[%s337] sm:$0xff]
        %v816 = vld [vmem:[%s344] sm:$0xff]
        %v817 = vld [vmem:[%s3] sm:$0x3]
        %v818 = vlaneseq
        %v819 = vshrl.u32 %v818, 7
        %v820 = vsub.s32 0, %v819
        %v821 = vrot.slane %v817, %v820
        %vm822 = vcmp.eq.s32.totalorder %v816, 1
        %v823 = vlaneseq
        %v824 = vshrl.u32 %v823, 7
        %v825 = vsub.s32 1, %v824
        %v826 = vrot.slane %v817, %v825
        %v827 = vsel %vm822, 1, 0
        %828 = vset.pattern.permute.xlu0 0
        %829 = vperm.xlu0 %828, %v827
        %v830 = vpop.permute.xlu0 %829
        %vm831 = vcmp.eq.s32.totalorder %v830, 1
        %v832 = vsel %vm831, %v826, %v821
        %v833 = vadd.f32 %v815, %v832
        %v834 = vld [vmem:[%s351] sm:$0xff]
        %v835 = vld [vmem:[%s4] sm:$0xff]
        %v836 = vld [vmem:[%s4 + $0x8] sm:$0xff]
        %v837 = vld [vmem:[%s4 + $0x10] sm:$0xff]
        %v838 = vld [vmem:[%s4 + $0x18] sm:$0xff]
        %v839 = vld [vmem:[%s4 + $0x20] sm:$0xff]
        %v840 = vld [vmem:[%s4 + $0x28] sm:$0xff]
        %v841 = vld [vmem:[%s4 + $0x30] sm:$0xff]
        %v842 = vld [vmem:[%s4 + $0x38] sm:$0xff]
        %v843 = vlaneseq
        %v844 = vand.u32 %v843, 127
        %845 = vset.pattern.permute.xlu0 0
        %846 = vperm.xlu0 %845, %v834
        %v847 = vpop.permute.xlu0 %846
        %vm848 = vcmp.eq.s32.totalorder %v847, %v844
        %v849 = vsel %vm848, 1, 0
        %v850 = vcvt.s32.f32 %v849
        %vm851 = vcmask 523264
        %v853 = vsel %vm851, %v850, 0
        %855 = vmatprep.subr.mxu0 0.0
        %856 = vmatpush1.msra.mxu0 0.0
        %857 = vmatprep.subr.mxu0 0.0
        %858 = vmatpush1.msra.mxu0 0.0
        %859 = vmatprep.subr.mxu0 0.0
        %860 = vmatpush1.msra.mxu0 0.0
        %861 = vmatprep.subr.mxu0 0.0
        %862 = vmatpush1.msra.mxu0 0.0
        %863 = vmatprep.subr.mxu0 0.0
        %864 = vmatpush1.msra.mxu0 0.0
        %865 = vmatprep.subr.mxu0 0.0
        %866 = vmatpush1.msra.mxu0 0.0
        %867 = vmatprep.subr.mxu0 0.0
        %868 = vmatpush1.msra.mxu0 0.0
        %869 = vmatprep.subr.mxu0 0.0
        %870 = vmatpush1.msra.mxu0 0.0
        %871 = vmatprep.subr.mxu0 0.0
        %872 = vmatpush1.msra.mxu0 %v842
        %873 = vmatprep.subr.mxu0 0.0
        %874 = vmatpush1.msra.mxu0 %v841
        %875 = vmatprep.subr.mxu0 0.0
        %876 = vmatpush1.msra.mxu0 %v840
        %877 = vmatprep.subr.mxu0 0.0
        %878 = vmatpush1.msra.mxu0 %v839
        %879 = vmatprep.subr.mxu0 0.0
        %880 = vmatpush1.msra.mxu0 %v838
        %881 = vmatprep.subr.mxu0 0.0
        %882 = vmatpush1.msra.mxu0 %v837
        %883 = vmatprep.subr.mxu0 0.0
        %884 = vmatpush1.msra.mxu0 %v836
        %885 = vmatprep.subr.mxu0 0.0
        %886 = vmatpush1.msra.mxu0 %v835
        %887 = vmatprep.subr.mxu0 0.0
        %888 = vmatpush2.msra.mxu0 0.0
        %889 = vmatprep.subr.mxu0 0.0
        %890 = vmatpush2.msra.mxu0 0.0
        %891 = vmatprep.subr.mxu0 0.0
        %892 = vmatpush2.msra.mxu0 0.0
        %893 = vmatprep.subr.mxu0 0.0
        %894 = vmatpush2.msra.mxu0 0.0
        %895 = vmatprep.subr.mxu0 0.0
        %896 = vmatpush2.msra.mxu0 0.0
        %897 = vmatprep.subr.mxu0 0.0
        %898 = vmatpush2.msra.mxu0 0.0
        %899 = vmatprep.subr.mxu0 0.0
        %900 = vmatpush2.msra.mxu0 0.0
        %901 = vmatprep.subr.mxu0 0.0
        %902 = vmatpush2.msra.mxu0 0.0
        %903 = vmatprep.subr.mxu0 0.0
        %904 = vmatpush2.msra.mxu0 0.0
        %905 = vmatprep.subr.mxu0 0.0
        %906 = vmatpush2.msra.mxu0 0.0
        %907 = vmatprep.subr.mxu0 0.0
        %908 = vmatpush2.msra.mxu0 0.0
        %909 = vmatprep.subr.mxu0 0.0
        %910 = vmatpush2.msra.mxu0 0.0
        %911 = vmatprep.subr.mxu0 0.0
        %912 = vmatpush2.msra.mxu0 0.0
        %913 = vmatprep.subr.mxu0 0.0
        %914 = vmatpush2.msra.mxu0 0.0
        %915 = vmatprep.subr.mxu0 0.0
        %916 = vmatpush2.msra.mxu0 0.0
        %917 = vmatprep.subr.mxu0 0.0
        %918 = vmatpush2.msra.mxu0 0.0
        %919 = vmatprep.mubr.f32.mxu0 0.0
        %920 = vmatmul.mubr.f32.gmra.mxu0 %v853
        %v921 = vpop.f32.mrf.mxu0
        %v922 = vadd.f32 0.0, %v921
        %v923 = vpop.f32.mrf.mxu0
        %924 = vdwg.mxu0
        %v925 = vadd.f32 %v833, %v922
        %s926 = smul.u32 8, 1
        %s927 = sshll.u32 %s926, 4
        %928 = dma.done [#allocation3], %s927
        %v929 = vld [vmem:[#allocation2] sm:$0xff]
        %v930 = vadd.f32 %v925, %v929
        %vm931 = vcmask 261120
        %v932 = vsel %vm931, %v930, 0.0
        %933 = vadd.xlane.f32.xlu0 %v932
        %v934 = vpop.xlane.xlu0 %933
        %v935 = vrcp.pop 32.0
        %v936 = vmul.f32 %v934, %v935
        %v937 = vsub.f32 %v930, %v936
        %v938 = vmul.f32 %v937, %v937
        %v939 = vsel %vm931, %v938, 0.0
        %940 = vadd.xlane.f32.xlu0 %v939
        %v941 = vpop.xlane.xlu0 %940
        %v942 = vmul.f32 %v941, %v935
        %v943 = vadd.f32 %v942, 1e-12
        %v944 = vrsqrt.pop %v943
        %v945 = vmul.f32 %v937, %v944
        %v946 = vld [vmem:[%s7] sm:$0x1]
        %v948 = vlaneseq
        %v949 = vshrl.u32 %v948, 7
        %v950 = vsub.s32 0, %v949
        %v951 = vrot.slane %v946, %v950
        %v953 = vmul.f32 %v945, %v951
        %v954 = vld [vmem:[%s8] sm:$0x1]
        %v956 = vlaneseq
        %v957 = vshrl.u32 %v956, 7
        %v958 = vsub.s32 0, %v957
        %v959 = vrot.slane %v954, %v958
        %v961 = vadd.f32 %v953, %v959
        %962 = vst.msk [vmem:[%s333] sm:$0xff] %vm931, %v961
        %s963 = sand.u32 %s217, 1
        %s964 = scalar_lea.sflag [#allocation7], %s963
        %s965 = sand.u32 %s217, 1
        %s966 = smul.addr %s965, 8
        %s967 = scalar_lea.vmem [#allocation6], %s966
        // Predicated region
        $region289: #{tpu_custom_call.1} parent=47 // pred_check
          %p968 = pneg %p227
        $region290: #{tpu_custom_call.1} parent=47 // pred_check_branch
          %970 = sbr.rel (%p968) target = $region292
        $region291: #{tpu_custom_call.1} parent=47 // pred_region
          %s972 = ssub.s32 128, 128
          %973 = vsyncadd %s964, %s972
          %s974 = sadd.s32 %s33, %s34
          %s975 = smul.addr %s974, 128
          %s976 = scalar_lea.hbm %s9, %s975
          %s978 = sshll.u32 %s967, 4
          %s979 = int_to_ptr.vmem [resolvable:$true] %s978
          %981 = dma.vmem_to_hbm [thread:$0]  %s979, 128, %s976, %s964
        $region292: #{tpu_custom_call.1} parent=47 // pred_fallthru
          _
      $region48: #{tpu_custom_call.1} parent=5 // pred_fallthru
        _
      %p982 = scmp.le.s32.totalorder 2, %s24
      // Predicated region
      $region293: #{tpu_custom_call.1} parent=5 // pred_check
        %p983 = pneg %p982
      $region294: #{tpu_custom_call.1} parent=5 // pred_check_branch
        %985 = sbr.rel (%p983) target = $region296
      $region295: #{tpu_custom_call.1} parent=5 // pred_region
        %s986 = ssub.s32 %s24, 2
        // Predicated region
        $region297: #{tpu_custom_call.1} parent=295 // pred_check
          %p987 = pneg %p233
        $region298: #{tpu_custom_call.1} parent=295 // pred_check_branch
          %989 = sbr.rel (%p987) target = $region300
        $region299: #{tpu_custom_call.1} parent=295 // pred_region
          %s990 = sand.u32 %s218, 1
          %s991 = scalar_lea.sflag [#allocation7], %s990
          %s992 = sand.u32 %s218, 1
          %s993 = smul.addr %s992, 8
          %s994 = scalar_lea.vmem [#allocation6], %s993
          %995 = dma.done %s991, 128
        $region300: #{tpu_custom_call.1} parent=295 // pred_fallthru
          _
      $region296: #{tpu_custom_call.1} parent=5 // pred_fallthru
        _
    $region6: #{tpu_custom_call.1} parent=1 // loop_footer
      %s28 = sadd.s32 1, %s24
    $region7: #{tpu_custom_call.1} parent=1 // loop_footer_branch
      %23 = sbr.rel target = $region3
    $region8: #{tpu_custom_call.1} parent=1 // loop_exit
      _
    %996 = vsyncpa [#allocation7], 1
    %s997 = scalar_lea.sflag [#allocation7], 1
    %998 = vsyncpa %s997, 1
  %999 = vsyncmov [#allocation3]
  %s1000 = vpop.sfrf %999
  %p1001 = scmp.eq.s32.totalorder %s1000, 0
  %p1002 = pneg %p1001
  %1004 = shalt.err (%p1002)

</llo_original>
